<compile_context>
chip_gen: v7x
topology: tpu7x:2x2x1
jax: 0.10.0
libtpu: 0.0.40
codegen_flags: <defaults>
</compile_context>

<pallas_src>
import functools
import math

import numpy as np
import jax
import jax.numpy as jnp
from jax import lax
from jax.experimental import pallas as pl
from jax.experimental.pallas import tpu as pltpu


def _gelu_exact(x):
    # PyTorch nn.GELU() / F.gelu default: exact erf-based GELU.
    return 0.5 * x * (1.0 + lax.erf(x * (1.0 / math.sqrt(2.0))))


# ---------------------------------------------------------------------------
# Fused kernel: one (batch, dilation-stage) grid step.
# ---------------------------------------------------------------------------
def _fused_kernel(x_ref, bw_ref, bb_ref, wm_ref, db_ref, o_ref, h_ref,
                  *, H, W, C, dilation):
    # x_ref:  (1, Cin, H*W)   input image, channels on sublanes, H*W on lanes
    # bw_ref: (C, Cin)        1x1 conv weight (transposed)
    # bb_ref: (C, H*W)        1x1 conv bias, lane-broadcast
    # wm_ref: (1, 9, C, H*W)  this stage's 9 taps, mask-baked & lane-broadcast
    # db_ref: (1, C, H*W)     this stage's bias, lane-broadcast
    # o_ref:  (1, 1, C, H*W)  this stage's output slab
    # h_ref:  (C, H*W) f32    carried activation (VMEM scratch)
    HW = H * W
    k = pl.program_id(1)

    # ---- stage 0 only: 1x1 conv (channel matmul) + bias + GELU -------------
    # Tiny matmul; default MXU precision matched the f32 reference within
    # tolerance previously, so it is kept (no precision arg).
    @pl.when(k == 0)
    def _():
        h0 = jnp.dot(bw_ref[...], x_ref[0], preferred_element_type=jnp.float32)
        h_ref[...] = _gelu_exact(h0 + bb_ref[...])

    h = h_ref[...]        # (C, H*W): 4 dense f32 vregs at C=16, H*W=256
    bias_k = db_ref[0]    # (C, H*W)

    # ---- dilated depthwise 3x3 conv + GELU for the current stage -----------
    # Spatial +-d shifts = lane rotations of the flattened H*W axis (XLU).
    # Wrap-around / out-of-image lanes contribute 0 because the masks are
    # pre-multiplied into wm_ref on the host.
    for ki, d in enumerate(dilation):
        @pl.when(k == ki)
        def _(d=d):
            offs = [(dh, dw) for dh in (-d, 0, d) for dw in (-d, 0, d)]
            accs = [None, None, None]   # 3 partial sums: shorter VALU dep chain
            for t, (dh, dw) in enumerate(offs):
                s = dh * W + dw
                v = h if s == 0 else pltpu.roll(h, shift=(-s) % HW, axis=1)
                term = v * wm_ref[0, t]          # per-tap load: keeps vregs low
                g = t // 3
                accs[g] = term if accs[g] is None else accs[g] + term
            hn = _gelu_exact((accs[0] + accs[1]) + (accs[2] + bias_k))
            h_ref[...] = hn                       # carried to stage k+1
            o_ref[0, 0] = hn.astype(o_ref.dtype)  # full-width, unmasked store


def convolution_layer_forward(x, params, dilation):
    # x: (B, H, W, input_size) -> out: (B, H, W, channels * len(dilation))
    B, H, W, Cin = x.shape
    C = params["base_w"].shape[1]
    K = len(dilation)
    HW = H * W

    # --- layout plumbing (host side, cheap) ---------------------------------
    # Channels on sublanes, flattened spatial on lanes (mirrors the module's
    # own permute(0, 3, 1, 2)).
    x_t = jnp.transpose(x, (0, 3, 1, 2)).reshape(B, Cin, HW)        # (B,Cin,HW)
    bw_t = params["base_w"].T                                       # (C, Cin)
    bb_full = jnp.broadcast_to(params["base_b"].reshape(C, 1), (C, HW))
    db_full = jnp.broadcast_to(params["dw_b"][:, :, None], (K, C, HW))

    # Per-tap validity masks (static): lane l = y*W + x is valid for offset
    # (dh, dw) iff (y+dh, x+dw) is inside the image.  Baked into the weights.
    masks = np.zeros((K, 9, HW), np.float32)
    for kk, d in enumerate(dilation):
        t = 0
        for dh in (-d, 0, d):
            for dw in (-d, 0, d):
                mh = (np.arange(H) + dh >= 0) & (np.arange(H) + dh < H)
                mw = (np.arange(W) + dw >= 0) & (np.arange(W) + dw < W)
                masks[kk, t] = (mh[:, None] & mw[None, :]).reshape(HW)
                t += 1
    dw_taps = params["dw_w"].reshape(K, 9, C)                       # (K,9,C)
    dw_wm = dw_taps[:, :, :, None] * jnp.asarray(masks)[:, :, None, :]  # (K,9,C,HW)

    # --- explicit VMEM budget (double-buffered blocks + scratch) ------------
    resident_bytes = 4 * (
        2 * Cin * HW          # x block
        + 2 * C * Cin         # 1x1 weight
        + 2 * C * HW          # 1x1 bias
        + 2 * 9 * C * HW      # masked taps for one stage
        + 2 * C * HW          # stage bias
        + 2 * C * HW          # output slab
        + C * HW              # carried-h scratch
    )
    vmem_limit = int(min(64 * 1024 * 1024, max(16 * 1024 * 1024, 2 * resident_bytes)))

    kern = functools.partial(_fused_kernel, H=H, W=W, C=C,
                             dilation=tuple(dilation))

    out = pl.pallas_call(
        kern,
        out_shape=jax.ShapeDtypeStruct((B, K, C, HW), x.dtype),
        grid_spec=pltpu.PrefetchScalarGridSpec(
            num_scalar_prefetch=0,
            grid=(B, K),
            in_specs=[
                pl.BlockSpec((1, Cin, HW), lambda b, k: (b, 0, 0)),
                pl.BlockSpec((C, Cin), lambda b, k: (0, 0)),
                pl.BlockSpec((C, HW), lambda b, k: (0, 0)),
                pl.BlockSpec((1, 9, C, HW), lambda b, k: (k, 0, 0, 0)),
                pl.BlockSpec((1, C, HW), lambda b, k: (k, 0, 0)),
            ],
            out_specs=pl.BlockSpec((1, 1, C, HW), lambda b, k: (b, k, 0, 0)),
            scratch_shapes=[pltpu.VMEM((C, HW), jnp.float32)],
        ),
        compiler_params=pltpu.CompilerParams(
            dimension_semantics=("parallel", "arbitrary"),
            vmem_limit_bytes=vmem_limit,
        ),
    )(x_t, bw_t, bb_full, dw_wm, db_full)

    # (B, K, C, H*W) -> (B, H, W, K*C)  (matches torch.cat on NCHW channels
    # followed by permute back to NHWC).
    out = out.reshape(B, K, C, H, W)
    out = jnp.transpose(out, (0, 3, 4, 1, 2))
    return out.reshape(B, H, W, K * C)


# ---------------------------------------------------------------------------
# Parameter init (PyTorch weight layouts noted in comments)
# ---------------------------------------------------------------------------
def init_params(key, input_size, channels, dilation):
    K = len(dilation)
    keys = jax.random.split(key, 4)
    return {
        # Conv2d(in, out, 1) weight is (out, in, 1, 1); stored here as (in, out).
        "base_w": 0.1 * jax.random.normal(keys[0], (input_size, channels), jnp.float32),
        "base_b": 0.1 * jax.random.normal(keys[1], (1, channels), jnp.float32),
        # Depthwise Conv2d(C, C, 3, groups=C) weight is (C, 1, 3, 3); stored as (K, 3, 3, C).
        "dw_w": 0.1 * jax.random.normal(keys[2], (K, 3, 3, channels), jnp.float32),
        "dw_b": 0.1 * jax.random.normal(keys[3], (K, channels), jnp.float32),
    }


# ---------------------------------------------------------------------------
# Pure-JAX reference (for correctness check)
# ---------------------------------------------------------------------------
def reference_forward(x, params, dilation):
    hi = lax.Precision.HIGHEST
    h = jnp.einsum("bhwc,cd->bhwd", x, params["base_w"], precision=hi)
    h = _gelu_exact(h + params["base_b"][0])
    outs = []
    C = h.shape[-1]
    for k, d in enumerate(dilation):
        rhs = params["dw_w"][k].reshape(3, 3, 1, C)
        h = lax.conv_general_dilated(
            h, rhs,
            window_strides=(1, 1),
            padding=[(d, d), (d, d)],
            rhs_dilation=(d, d),
            dimension_numbers=("NHWC", "HWIO", "NHWC"),
            feature_group_count=C,
            precision=hi,
        ) + params["dw_b"][k]
        h = _gelu_exact(h)
        outs.append(h)
    return jnp.concatenate(outs, axis=-1)


if __name__ == "__main__":
    B, H, W = 2, 16, 16
    input_size, channels = 32, 16
    dilation = (1, 2, 3)

    key = jax.random.PRNGKey(0)
    kx, kp = jax.random.split(key)
    x = jax.random.normal(kx, (B, H, W, input_size), jnp.float32)
    params = init_params(kp, input_size, channels, dilation)

    fwd = jax.jit(lambda xx, pp: convolution_layer_forward(xx, pp, dilation))
    out = jax.block_until_ready(fwd(x, params))
    assert out.shape == (B, H, W, channels * len(dilation)), out.shape

    ref = jax.block_until_ready(reference_forward(x, params, dilation))
    err = float(jnp.max(jnp.abs(out - ref)))
    assert jnp.allclose(out, ref, atol=3e-4, rtol=3e-4), err

    print("KERNEL_OK")
</pallas_src>

<mosaic_0001>
module attributes {stable_mosaic.version = 11 : i64} {
  func.func @_fused_kernel(%arg0: i32, %arg1: i32, %arg2: memref<1x32x256xf32, #tpu.memory_space<vmem>>, %arg3: memref<16x32xf32, #tpu.memory_space<vmem>>, %arg4: memref<16x256xf32, #tpu.memory_space<vmem>>, %arg5: memref<1x9x16x256xf32, #tpu.memory_space<vmem>>, %arg6: memref<1x16x256xf32, #tpu.memory_space<vmem>>, %arg7: memref<1x1x16x256xf32, #tpu.memory_space<vmem>>, %arg8: memref<16x256xf32, #tpu.memory_space<vmem>>) attributes {dimension_semantics = [#tpu.dimension_semantics<parallel>, #tpu.dimension_semantics<arbitrary>], iteration_bounds = array<i64: 2, 3>, scalar_prefetch = 0 : i64, scratch_operands = 1 : i64, tpu.core_type = #tpu.core_type<tc>, window_params = [{transform_indices = @transform_0, window_bounds = array<i64: 1, 32, 256>}, {pipeline_mode = #tpu.pipeline_mode<synchronous>, transform_indices = @transform_1, window_bounds = array<i64: 16, 32>}, {pipeline_mode = #tpu.pipeline_mode<synchronous>, transform_indices = @transform_2, window_bounds = array<i64: 16, 256>}, {transform_indices = @transform_3, window_bounds = array<i64: 1, 9, 16, 256>}, {transform_indices = @transform_4, window_bounds = array<i64: 1, 16, 256>}, {transform_indices = @transform_5, window_bounds = array<i64: 1, 1, 16, 256>}]} {
    %c0_i32 = arith.constant 0 : i32
    %0 = arith.cmpi eq, %arg1, %c0_i32 : i32
    %1 = arith.extui %0 : i1 to i32
    %c0_i32_0 = arith.constant 0 : i32
    %2 = arith.cmpi ne, %1, %c0_i32_0 : i32
    scf.if %2 {
      %c0_9 = arith.constant 0 : index
      %c0_10 = arith.constant 0 : index
      %15 = vector.load %arg3[%c0_9, %c0_10] : memref<16x32xf32, #tpu.memory_space<vmem>>, vector<16x32xf32>
      %c0_11 = arith.constant 0 : index
      %c0_12 = arith.constant 0 : index
      %c0_13 = arith.constant 0 : index
      %16 = vector.load %arg2[%c0_11, %c0_12, %c0_13] : memref<1x32x256xf32, #tpu.memory_space<vmem>>, vector<1x32x256xf32>
      %17 = vector.shape_cast %16 : vector<1x32x256xf32> to vector<32x256xf32>
      %cst = arith.constant dense<0.000000e+00> : vector<16x256xf32>
      %18 = tpu.matmul %15, %17, %cst {dimension_numbers = #tpu.dot_dimension_numbers<[1], [0], [0], [1], [0, 0, 1, 1], [], []>} : vector<16x32xf32>, vector<32x256xf32>, vector<16x256xf32> -> vector<16x256xf32>
      %c0_14 = arith.constant 0 : index
      %c0_15 = arith.constant 0 : index
      %19 = vector.load %arg4[%c0_14, %c0_15] : memref<16x256xf32, #tpu.memory_space<vmem>>, vector<16x256xf32>
      %20 = arith.addf %18, %19 : vector<16x256xf32>
      %cst_16 = arith.constant 5.000000e-01 : f32
      %21 = vector.broadcast %cst_16 : f32 to vector<16x256xf32>
      %22 = arith.mulf %21, %20 : vector<16x256xf32>
      %cst_17 = arith.constant 0.707106769 : f32
      %23 = vector.broadcast %cst_17 : f32 to vector<16x256xf32>
      %24 = arith.mulf %20, %23 : vector<16x256xf32>
      %25 = math.erf %24 : vector<16x256xf32>
      %cst_18 = arith.constant 1.000000e+00 : f32
      %26 = vector.broadcast %cst_18 : f32 to vector<16x256xf32>
      %27 = arith.addf %26, %25 : vector<16x256xf32>
      %28 = arith.mulf %22, %27 : vector<16x256xf32>
      %c0_19 = arith.constant 0 : index
      %c0_20 = arith.constant 0 : index
      %29 = vector.load %arg8[%c0_19, %c0_20] : memref<16x256xf32, #tpu.memory_space<vmem>>, vector<16x256xf32>
      tpu.vector_store %arg8[%c0_19, %c0_20], %28 {strides = array<i32>} : memref<16x256xf32, #tpu.memory_space<vmem>>, vector<16x256xf32>,
    } else {
    }
    %c0 = arith.constant 0 : index
    %c0_1 = arith.constant 0 : index
    %3 = vector.load %arg8[%c0, %c0_1] : memref<16x256xf32, #tpu.memory_space<vmem>>, vector<16x256xf32>
    %c0_2 = arith.constant 0 : index
    %c0_3 = arith.constant 0 : index
    %c0_4 = arith.constant 0 : index
    %4 = vector.load %arg6[%c0_2, %c0_3, %c0_4] : memref<1x16x256xf32, #tpu.memory_space<vmem>>, vector<1x16x256xf32>
    %5 = vector.shape_cast %4 : vector<1x16x256xf32> to vector<16x256xf32>
    %c0_i32_5 = arith.constant 0 : i32
    %6 = arith.cmpi eq, %arg1, %c0_i32_5 : i32
    %7 = arith.extui %6 : i1 to i32
    %c0_i32_6 = arith.constant 0 : i32
    %8 = arith.cmpi ne, %7, %c0_i32_6 : i32
    scf.if %8 {
      %c17_i32 = arith.constant 17 : i32
      %15 = tpu.dynamic_rotate %3 by %c17_i32 dim 1 : vector<16x256xf32>, i32 -> vector<16x256xf32>
      %c0_9 = arith.constant 0 : index
      %c0_10 = arith.constant 0 : index
      %c0_11 = arith.constant 0 : index
      %c0_12 = arith.constant 0 : index
      %16 = vector.load %arg5[%c0_9, %c0_10, %c0_11, %c0_12] : memref<1x9x16x256xf32, #tpu.memory_space<vmem>>, vector<1x1x16x256xf32>
      %17 = vector.shape_cast %16 : vector<1x1x16x256xf32> to vector<16x256xf32>
      %18 = arith.mulf %15, %17 : vector<16x256xf32>
      %c16_i32 = arith.constant 16 : i32
      %19 = tpu.dynamic_rotate %3 by %c16_i32 dim 1 : vector<16x256xf32>, i32 -> vector<16x256xf32>
      %c0_13 = arith.constant 0 : index
      %c1 = arith.constant 1 : index
      %c0_14 = arith.constant 0 : index
      %c0_15 = arith.constant 0 : index
      %20 = vector.load %arg5[%c0_13, %c1, %c0_14, %c0_15] : memref<1x9x16x256xf32, #tpu.memory_space<vmem>>, vector<1x1x16x256xf32>
      %21 = vector.shape_cast %20 : vector<1x1x16x256xf32> to vector<16x256xf32>
      %22 = arith.mulf %19, %21 : vector<16x256xf32>
      %23 = arith.addf %18, %22 : vector<16x256xf32>
      %c15_i32 = arith.constant 15 : i32
      %24 = tpu.dynamic_rotate %3 by %c15_i32 dim 1 : vector<16x256xf32>, i32 -> vector<16x256xf32>
      %c0_16 = arith.constant 0 : index
      %c2 = arith.constant 2 : index
      %c0_17 = arith.constant 0 : index
      %c0_18 = arith.constant 0 : index
      %25 = vector.load %arg5[%c0_16, %c2, %c0_17, %c0_18] : memref<1x9x16x256xf32, #tpu.memory_space<vmem>>, vector<1x1x16x256xf32>
      %26 = vector.shape_cast %25 : vector<1x1x16x256xf32> to vector<16x256xf32>
      %27 = arith.mulf %24, %26 : vector<16x256xf32>
      %28 = arith.addf %23, %27 : vector<16x256xf32>
      %c1_i32_19 = arith.constant 1 : i32
      %29 = tpu.dynamic_rotate %3 by %c1_i32_19 dim 1 : vector<16x256xf32>, i32 -> vector<16x256xf32>
      %c0_20 = arith.constant 0 : index
      %c3 = arith.constant 3 : index
      %c0_21 = arith.constant 0 : index
      %c0_22 = arith.constant 0 : index
      %30 = vector.load %arg5[%c0_20, %c3, %c0_21, %c0_22] : memref<1x9x16x256xf32, #tpu.memory_space<vmem>>, vector<1x1x16x256xf32>
      %31 = vector.shape_cast %30 : vector<1x1x16x256xf32> to vector<16x256xf32>
      %32 = arith.mulf %29, %31 : vector<16x256xf32>
      %c0_23 = arith.constant 0 : index
      %c4 = arith.constant 4 : index
      %c0_24 = arith.constant 0 : index
      %c0_25 = arith.constant 0 : index
      %33 = vector.load %arg5[%c0_23, %c4, %c0_24, %c0_25] : memref<1x9x16x256xf32, #tpu.memory_space<vmem>>, vector<1x1x16x256xf32>
      %34 = vector.shape_cast %33 : vector<1x1x16x256xf32> to vector<16x256xf32>
      %35 = arith.mulf %3, %34 : vector<16x256xf32>
      %36 = arith.addf %32, %35 : vector<16x256xf32>
      %c255_i32 = arith.constant 255 : i32
      %37 = tpu.dynamic_rotate %3 by %c255_i32 dim 1 : vector<16x256xf32>, i32 -> vector<16x256xf32>
      %c0_26 = arith.constant 0 : index
      %c5 = arith.constant 5 : index
      %c0_27 = arith.constant 0 : index
      %c0_28 = arith.constant 0 : index
      %38 = vector.load %arg5[%c0_26, %c5, %c0_27, %c0_28] : memref<1x9x16x256xf32, #tpu.memory_space<vmem>>, vector<1x1x16x256xf32>
      %39 = vector.shape_cast %38 : vector<1x1x16x256xf32> to vector<16x256xf32>
      %40 = arith.mulf %37, %39 : vector<16x256xf32>
      %41 = arith.addf %36, %40 : vector<16x256xf32>
      %c241_i32 = arith.constant 241 : i32
      %42 = tpu.dynamic_rotate %3 by %c241_i32 dim 1 : vector<16x256xf32>, i32 -> vector<16x256xf32>
      %c0_29 = arith.constant 0 : index
      %c6 = arith.constant 6 : index
      %c0_30 = arith.constant 0 : index
      %c0_31 = arith.constant 0 : index
      %43 = vector.load %arg5[%c0_29, %c6, %c0_30, %c0_31] : memref<1x9x16x256xf32, #tpu.memory_space<vmem>>, vector<1x1x16x256xf32>
      %44 = vector.shape_cast %43 : vector<1x1x16x256xf32> to vector<16x256xf32>
      %45 = arith.mulf %42, %44 : vector<16x256xf32>
      %c240_i32 = arith.constant 240 : i32
      %46 = tpu.dynamic_rotate %3 by %c240_i32 dim 1 : vector<16x256xf32>, i32 -> vector<16x256xf32>
      %c0_32 = arith.constant 0 : index
      %c7 = arith.constant 7 : index
      %c0_33 = arith.constant 0 : index
      %c0_34 = arith.constant 0 : index
      %47 = vector.load %arg5[%c0_32, %c7, %c0_33, %c0_34] : memref<1x9x16x256xf32, #tpu.memory_space<vmem>>, vector<1x1x16x256xf32>
      %48 = vector.shape_cast %47 : vector<1x1x16x256xf32> to vector<16x256xf32>
      %49 = arith.mulf %46, %48 : vector<16x256xf32>
      %50 = arith.addf %45, %49 : vector<16x256xf32>
      %c239_i32 = arith.constant 239 : i32
      %51 = tpu.dynamic_rotate %3 by %c239_i32 dim 1 : vector<16x256xf32>, i32 -> vector<16x256xf32>
      %c0_35 = arith.constant 0 : index
      %c8 = arith.constant 8 : index
      %c0_36 = arith.constant 0 : index
      %c0_37 = arith.constant 0 : index
      %52 = vector.load %arg5[%c0_35, %c8, %c0_36, %c0_37] : memref<1x9x16x256xf32, #tpu.memory_space<vmem>>, vector<1x1x16x256xf32>
      %53 = vector.shape_cast %52 : vector<1x1x16x256xf32> to vector<16x256xf32>
      %54 = arith.mulf %51, %53 : vector<16x256xf32>
      %55 = arith.addf %50, %54 : vector<16x256xf32>
      %56 = arith.addf %28, %41 : vector<16x256xf32>
      %57 = arith.addf %55, %5 : vector<16x256xf32>
      %58 = arith.addf %56, %57 : vector<16x256xf32>
      %cst = arith.constant 5.000000e-01 : f32
      %59 = vector.broadcast %cst : f32 to vector<16x256xf32>
      %60 = arith.mulf %59, %58 : vector<16x256xf32>
      %cst_38 = arith.constant 0.707106769 : f32
      %61 = vector.broadcast %cst_38 : f32 to vector<16x256xf32>
      %62 = arith.mulf %58, %61 : vector<16x256xf32>
      %63 = math.erf %62 : vector<16x256xf32>
      %cst_39 = arith.constant 1.000000e+00 : f32
      %64 = vector.broadcast %cst_39 : f32 to vector<16x256xf32>
      %65 = arith.addf %64, %63 : vector<16x256xf32>
      %66 = arith.mulf %60, %65 : vector<16x256xf32>
      %c0_40 = arith.constant 0 : index
      %c0_41 = arith.constant 0 : index
      %67 = vector.load %arg8[%c0_40, %c0_41] : memref<16x256xf32, #tpu.memory_space<vmem>>, vector<16x256xf32>
      tpu.vector_store %arg8[%c0_40, %c0_41], %66 {strides = array<i32>} : memref<16x256xf32, #tpu.memory_space<vmem>>, vector<16x256xf32>,
      %c0_42 = arith.constant 0 : index
      %c0_43 = arith.constant 0 : index
      %c0_44 = arith.constant 0 : index
      %c0_45 = arith.constant 0 : index
      %68 = vector.load %arg7[%c0_42, %c0_43, %c0_44, %c0_45] : memref<1x1x16x256xf32, #tpu.memory_space<vmem>>, vector<1x1x16x256xf32>
      %69 = vector.shape_cast %68 : vector<1x1x16x256xf32> to vector<16x256xf32>
      %70 = vector.shape_cast %66 : vector<16x256xf32> to vector<1x1x16x256xf32>
      tpu.vector_store %arg7[%c0_42, %c0_43, %c0_44, %c0_45], %70 {strides = array<i32>} : memref<1x1x16x256xf32, #tpu.memory_space<vmem>>, vector<1x1x16x256xf32>,
    } else {
    }
    %c1_i32 = arith.constant 1 : i32
    %9 = arith.cmpi eq, %arg1, %c1_i32 : i32
    %10 = arith.extui %9 : i1 to i32
    %c0_i32_7 = arith.constant 0 : i32
    %11 = arith.cmpi ne, %10, %c0_i32_7 : i32
    scf.if %11 {
      %c34_i32 = arith.constant 34 : i32
      %15 = tpu.dynamic_rotate %3 by %c34_i32 dim 1 : vector<16x256xf32>, i32 -> vector<16x256xf32>
      %c0_9 = arith.constant 0 : index
      %c0_10 = arith.constant 0 : index
      %c0_11 = arith.constant 0 : index
      %c0_12 = arith.constant 0 : index
      %16 = vector.load %arg5[%c0_9, %c0_10, %c0_11, %c0_12] : memref<1x9x16x256xf32, #tpu.memory_space<vmem>>, vector<1x1x16x256xf32>
      %17 = vector.shape_cast %16 : vector<1x1x16x256xf32> to vector<16x256xf32>
      %18 = arith.mulf %15, %17 : vector<16x256xf32>
      %c32_i32 = arith.constant 32 : i32
      %19 = tpu.dynamic_rotate %3 by %c32_i32 dim 1 : vector<16x256xf32>, i32 -> vector<16x256xf32>
      %c0_13 = arith.constant 0 : index
      %c1 = arith.constant 1 : index
      %c0_14 = arith.constant 0 : index
      %c0_15 = arith.constant 0 : index
      %20 = vector.load %arg5[%c0_13, %c1, %c0_14, %c0_15] : memref<1x9x16x256xf32, #tpu.memory_space<vmem>>, vector<1x1x16x256xf32>
      %21 = vector.shape_cast %20 : vector<1x1x16x256xf32> to vector<16x256xf32>
      %22 = arith.mulf %19, %21 : vector<16x256xf32>
      %23 = arith.addf %18, %22 : vector<16x256xf32>
      %c30_i32 = arith.constant 30 : i32
      %24 = tpu.dynamic_rotate %3 by %c30_i32 dim 1 : vector<16x256xf32>, i32 -> vector<16x256xf32>
      %c0_16 = arith.constant 0 : index
      %c2 = arith.constant 2 : index
      %c0_17 = arith.constant 0 : index
      %c0_18 = arith.constant 0 : index
      %25 = vector.load %arg5[%c0_16, %c2, %c0_17, %c0_18] : memref<1x9x16x256xf32, #tpu.memory_space<vmem>>, vector<1x1x16x256xf32>
      %26 = vector.shape_cast %25 : vector<1x1x16x256xf32> to vector<16x256xf32>
      %27 = arith.mulf %24, %26 : vector<16x256xf32>
      %28 = arith.addf %23, %27 : vector<16x256xf32>
      %c2_i32_19 = arith.constant 2 : i32
      %29 = tpu.dynamic_rotate %3 by %c2_i32_19 dim 1 : vector<16x256xf32>, i32 -> vector<16x256xf32>
      %c0_20 = arith.constant 0 : index
      %c3 = arith.constant 3 : index
      %c0_21 = arith.constant 0 : index
      %c0_22 = arith.constant 0 : index
      %30 = vector.load %arg5[%c0_20, %c3, %c0_21, %c0_22] : memref<1x9x16x256xf32, #tpu.memory_space<vmem>>, vector<1x1x16x256xf32>
      %31 = vector.shape_cast %30 : vector<1x1x16x256xf32> to vector<16x256xf32>
      %32 = arith.mulf %29, %31 : vector<16x256xf32>
      %c0_23 = arith.constant 0 : index
      %c4 = arith.constant 4 : index
      %c0_24 = arith.constant 0 : index
      %c0_25 = arith.constant 0 : index
      %33 = vector.load %arg5[%c0_23, %c4, %c0_24, %c0_25] : memref<1x9x16x256xf32, #tpu.memory_space<vmem>>, vector<1x1x16x256xf32>
      %34 = vector.shape_cast %33 : vector<1x1x16x256xf32> to vector<16x256xf32>
      %35 = arith.mulf %3, %34 : vector<16x256xf32>
      %36 = arith.addf %32, %35 : vector<16x256xf32>
      %c254_i32 = arith.constant 254 : i32
      %37 = tpu.dynamic_rotate %3 by %c254_i32 dim 1 : vector<16x256xf32>, i32 -> vector<16x256xf32>
      %c0_26 = arith.constant 0 : index
      %c5 = arith.constant 5 : index
      %c0_27 = arith.constant 0 : index
      %c0_28 = arith.constant 0 : index
      %38 = vector.load %arg5[%c0_26, %c5, %c0_27, %c0_28] : memref<1x9x16x256xf32, #tpu.memory_space<vmem>>, vector<1x1x16x256xf32>
      %39 = vector.shape_cast %38 : vector<1x1x16x256xf32> to vector<16x256xf32>
      %40 = arith.mulf %37, %39 : vector<16x256xf32>
      %41 = arith.addf %36, %40 : vector<16x256xf32>
      %c226_i32 = arith.constant 226 : i32
      %42 = tpu.dynamic_rotate %3 by %c226_i32 dim 1 : vector<16x256xf32>, i32 -> vector<16x256xf32>
      %c0_29 = arith.constant 0 : index
      %c6 = arith.constant 6 : index
      %c0_30 = arith.constant 0 : index
      %c0_31 = arith.constant 0 : index
      %43 = vector.load %arg5[%c0_29, %c6, %c0_30, %c0_31] : memref<1x9x16x256xf32, #tpu.memory_space<vmem>>, vector<1x1x16x256xf32>
      %44 = vector.shape_cast %43 : vector<1x1x16x256xf32> to vector<16x256xf32>
      %45 = arith.mulf %42, %44 : vector<16x256xf32>
      %c224_i32 = arith.constant 224 : i32
      %46 = tpu.dynamic_rotate %3 by %c224_i32 dim 1 : vector<16x256xf32>, i32 -> vector<16x256xf32>
      %c0_32 = arith.constant 0 : index
      %c7 = arith.constant 7 : index
      %c0_33 = arith.constant 0 : index
      %c0_34 = arith.constant 0 : index
      %47 = vector.load %arg5[%c0_32, %c7, %c0_33, %c0_34] : memref<1x9x16x256xf32, #tpu.memory_space<vmem>>, vector<1x1x16x256xf32>
      %48 = vector.shape_cast %47 : vector<1x1x16x256xf32> to vector<16x256xf32>
      %49 = arith.mulf %46, %48 : vector<16x256xf32>
      %50 = arith.addf %45, %49 : vector<16x256xf32>
      %c222_i32 = arith.constant 222 : i32
      %51 = tpu.dynamic_rotate %3 by %c222_i32 dim 1 : vector<16x256xf32>, i32 -> vector<16x256xf32>
      %c0_35 = arith.constant 0 : index
      %c8 = arith.constant 8 : index
      %c0_36 = arith.constant 0 : index
      %c0_37 = arith.constant 0 : index
      %52 = vector.load %arg5[%c0_35, %c8, %c0_36, %c0_37] : memref<1x9x16x256xf32, #tpu.memory_space<vmem>>, vector<1x1x16x256xf32>
      %53 = vector.shape_cast %52 : vector<1x1x16x256xf32> to vector<16x256xf32>
      %54 = arith.mulf %51, %53 : vector<16x256xf32>
      %55 = arith.addf %50, %54 : vector<16x256xf32>
      %56 = arith.addf %28, %41 : vector<16x256xf32>
      %57 = arith.addf %55, %5 : vector<16x256xf32>
      %58 = arith.addf %56, %57 : vector<16x256xf32>
      %cst = arith.constant 5.000000e-01 : f32
      %59 = vector.broadcast %cst : f32 to vector<16x256xf32>
      %60 = arith.mulf %59, %58 : vector<16x256xf32>
      %cst_38 = arith.constant 0.707106769 : f32
      %61 = vector.broadcast %cst_38 : f32 to vector<16x256xf32>
      %62 = arith.mulf %58, %61 : vector<16x256xf32>
      %63 = math.erf %62 : vector<16x256xf32>
      %cst_39 = arith.constant 1.000000e+00 : f32
      %64 = vector.broadcast %cst_39 : f32 to vector<16x256xf32>
      %65 = arith.addf %64, %63 : vector<16x256xf32>
      %66 = arith.mulf %60, %65 : vector<16x256xf32>
      %c0_40 = arith.constant 0 : index
      %c0_41 = arith.constant 0 : index
      %67 = vector.load %arg8[%c0_40, %c0_41] : memref<16x256xf32, #tpu.memory_space<vmem>>, vector<16x256xf32>
      tpu.vector_store %arg8[%c0_40, %c0_41], %66 {strides = array<i32>} : memref<16x256xf32, #tpu.memory_space<vmem>>, vector<16x256xf32>,
      %c0_42 = arith.constant 0 : index
      %c0_43 = arith.constant 0 : index
      %c0_44 = arith.constant 0 : index
      %c0_45 = arith.constant 0 : index
      %68 = vector.load %arg7[%c0_42, %c0_43, %c0_44, %c0_45] : memref<1x1x16x256xf32, #tpu.memory_space<vmem>>, vector<1x1x16x256xf32>
      %69 = vector.shape_cast %68 : vector<1x1x16x256xf32> to vector<16x256xf32>
      %70 = vector.shape_cast %66 : vector<16x256xf32> to vector<1x1x16x256xf32>
      tpu.vector_store %arg7[%c0_42, %c0_43, %c0_44, %c0_45], %70 {strides = array<i32>} : memref<1x1x16x256xf32, #tpu.memory_space<vmem>>, vector<1x1x16x256xf32>,
    } else {
    }
    %c2_i32 = arith.constant 2 : i32
    %12 = arith.cmpi eq, %arg1, %c2_i32 : i32
    %13 = arith.extui %12 : i1 to i32
    %c0_i32_8 = arith.constant 0 : i32
    %14 = arith.cmpi ne, %13, %c0_i32_8 : i32
    scf.if %14 {
      %c51_i32 = arith.constant 51 : i32
      %15 = tpu.dynamic_rotate %3 by %c51_i32 dim 1 : vector<16x256xf32>, i32 -> vector<16x256xf32>
      %c0_9 = arith.constant 0 : index
      %c0_10 = arith.constant 0 : index
      %c0_11 = arith.constant 0 : index
      %c0_12 = arith.constant 0 : index
      %16 = vector.load %arg5[%c0_9, %c0_10, %c0_11, %c0_12] : memref<1x9x16x256xf32, #tpu.memory_space<vmem>>, vector<1x1x16x256xf32>
      %17 = vector.shape_cast %16 : vector<1x1x16x256xf32> to vector<16x256xf32>
      %18 = arith.mulf %15, %17 : vector<16x256xf32>
      %c48_i32 = arith.constant 48 : i32
      %19 = tpu.dynamic_rotate %3 by %c48_i32 dim 1 : vector<16x256xf32>, i32 -> vector<16x256xf32>
      %c0_13 = arith.constant 0 : index
      %c1 = arith.constant 1 : index
      %c0_14 = arith.constant 0 : index
      %c0_15 = arith.constant 0 : index
      %20 = vector.load %arg5[%c0_13, %c1, %c0_14, %c0_15] : memref<1x9x16x256xf32, #tpu.memory_space<vmem>>, vector<1x1x16x256xf32>
      %21 = vector.shape_cast %20 : vector<1x1x16x256xf32> to vector<16x256xf32>
      %22 = arith.mulf %19, %21 : vector<16x256xf32>
      %23 = arith.addf %18, %22 : vector<16x256xf32>
      %c45_i32 = arith.constant 45 : i32
      %24 = tpu.dynamic_rotate %3 by %c45_i32 dim 1 : vector<16x256xf32>, i32 -> vector<16x256xf32>
      %c0_16 = arith.constant 0 : index
      %c2 = arith.constant 2 : index
      %c0_17 = arith.constant 0 : index
      %c0_18 = arith.constant 0 : index
      %25 = vector.load %arg5[%c0_16, %c2, %c0_17, %c0_18] : memref<1x9x16x256xf32, #tpu.memory_space<vmem>>, vector<1x1x16x256xf32>
      %26 = vector.shape_cast %25 : vector<1x1x16x256xf32> to vector<16x256xf32>
      %27 = arith.mulf %24, %26 : vector<16x256xf32>
      %28 = arith.addf %23, %27 : vector<16x256xf32>
      %c3_i32 = arith.constant 3 : i32
      %29 = tpu.dynamic_rotate %3 by %c3_i32 dim 1 : vector<16x256xf32>, i32 -> vector<16x256xf32>
      %c0_19 = arith.constant 0 : index
      %c3 = arith.constant 3 : index
      %c0_20 = arith.constant 0 : index
      %c0_21 = arith.constant 0 : index
      %30 = vector.load %arg5[%c0_19, %c3, %c0_20, %c0_21] : memref<1x9x16x256xf32, #tpu.memory_space<vmem>>, vector<1x1x16x256xf32>
      %31 = vector.shape_cast %30 : vector<1x1x16x256xf32> to vector<16x256xf32>
      %32 = arith.mulf %29, %31 : vector<16x256xf32>
      %c0_22 = arith.constant 0 : index
      %c4 = arith.constant 4 : index
      %c0_23 = arith.constant 0 : index
      %c0_24 = arith.constant 0 : index
      %33 = vector.load %arg5[%c0_22, %c4, %c0_23, %c0_24] : memref<1x9x16x256xf32, #tpu.memory_space<vmem>>, vector<1x1x16x256xf32>
      %34 = vector.shape_cast %33 : vector<1x1x16x256xf32> to vector<16x256xf32>
      %35 = arith.mulf %3, %34 : vector<16x256xf32>
      %36 = arith.addf %32, %35 : vector<16x256xf32>
      %c253_i32 = arith.constant 253 : i32
      %37 = tpu.dynamic_rotate %3 by %c253_i32 dim 1 : vector<16x256xf32>, i32 -> vector<16x256xf32>
      %c0_25 = arith.constant 0 : index
      %c5 = arith.constant 5 : index
      %c0_26 = arith.constant 0 : index
      %c0_27 = arith.constant 0 : index
      %38 = vector.load %arg5[%c0_25, %c5, %c0_26, %c0_27] : memref<1x9x16x256xf32, #tpu.memory_space<vmem>>, vector<1x1x16x256xf32>
      %39 = vector.shape_cast %38 : vector<1x1x16x256xf32> to vector<16x256xf32>
      %40 = arith.mulf %37, %39 : vector<16x256xf32>
      %41 = arith.addf %36, %40 : vector<16x256xf32>
      %c211_i32 = arith.constant 211 : i32
      %42 = tpu.dynamic_rotate %3 by %c211_i32 dim 1 : vector<16x256xf32>, i32 -> vector<16x256xf32>
      %c0_28 = arith.constant 0 : index
      %c6 = arith.constant 6 : index
      %c0_29 = arith.constant 0 : index
      %c0_30 = arith.constant 0 : index
      %43 = vector.load %arg5[%c0_28, %c6, %c0_29, %c0_30] : memref<1x9x16x256xf32, #tpu.memory_space<vmem>>, vector<1x1x16x256xf32>
      %44 = vector.shape_cast %43 : vector<1x1x16x256xf32> to vector<16x256xf32>
      %45 = arith.mulf %42, %44 : vector<16x256xf32>
      %c208_i32 = arith.constant 208 : i32
      %46 = tpu.dynamic_rotate %3 by %c208_i32 dim 1 : vector<16x256xf32>, i32 -> vector<16x256xf32>
      %c0_31 = arith.constant 0 : index
      %c7 = arith.constant 7 : index
      %c0_32 = arith.constant 0 : index
      %c0_33 = arith.constant 0 : index
      %47 = vector.load %arg5[%c0_31, %c7, %c0_32, %c0_33] : memref<1x9x16x256xf32, #tpu.memory_space<vmem>>, vector<1x1x16x256xf32>
      %48 = vector.shape_cast %47 : vector<1x1x16x256xf32> to vector<16x256xf32>
      %49 = arith.mulf %46, %48 : vector<16x256xf32>
      %50 = arith.addf %45, %49 : vector<16x256xf32>
      %c205_i32 = arith.constant 205 : i32
      %51 = tpu.dynamic_rotate %3 by %c205_i32 dim 1 : vector<16x256xf32>, i32 -> vector<16x256xf32>
      %c0_34 = arith.constant 0 : index
      %c8 = arith.constant 8 : index
      %c0_35 = arith.constant 0 : index
      %c0_36 = arith.constant 0 : index
      %52 = vector.load %arg5[%c0_34, %c8, %c0_35, %c0_36] : memref<1x9x16x256xf32, #tpu.memory_space<vmem>>, vector<1x1x16x256xf32>
      %53 = vector.shape_cast %52 : vector<1x1x16x256xf32> to vector<16x256xf32>
      %54 = arith.mulf %51, %53 : vector<16x256xf32>
      %55 = arith.addf %50, %54 : vector<16x256xf32>
      %56 = arith.addf %28, %41 : vector<16x256xf32>
      %57 = arith.addf %55, %5 : vector<16x256xf32>
      %58 = arith.addf %56, %57 : vector<16x256xf32>
      %cst = arith.constant 5.000000e-01 : f32
      %59 = vector.broadcast %cst : f32 to vector<16x256xf32>
      %60 = arith.mulf %59, %58 : vector<16x256xf32>
      %cst_37 = arith.constant 0.707106769 : f32
      %61 = vector.broadcast %cst_37 : f32 to vector<16x256xf32>
      %62 = arith.mulf %58, %61 : vector<16x256xf32>
      %63 = math.erf %62 : vector<16x256xf32>
      %cst_38 = arith.constant 1.000000e+00 : f32
      %64 = vector.broadcast %cst_38 : f32 to vector<16x256xf32>
      %65 = arith.addf %64, %63 : vector<16x256xf32>
      %66 = arith.mulf %60, %65 : vector<16x256xf32>
      %c0_39 = arith.constant 0 : index
      %c0_40 = arith.constant 0 : index
      %67 = vector.load %arg8[%c0_39, %c0_40] : memref<16x256xf32, #tpu.memory_space<vmem>>, vector<16x256xf32>
      tpu.vector_store %arg8[%c0_39, %c0_40], %66 {strides = array<i32>} : memref<16x256xf32, #tpu.memory_space<vmem>>, vector<16x256xf32>,
      %c0_41 = arith.constant 0 : index
      %c0_42 = arith.constant 0 : index
      %c0_43 = arith.constant 0 : index
      %c0_44 = arith.constant 0 : index
      %68 = vector.load %arg7[%c0_41, %c0_42, %c0_43, %c0_44] : memref<1x1x16x256xf32, #tpu.memory_space<vmem>>, vector<1x1x16x256xf32>
      %69 = vector.shape_cast %68 : vector<1x1x16x256xf32> to vector<16x256xf32>
      %70 = vector.shape_cast %66 : vector<16x256xf32> to vector<1x1x16x256xf32>
      tpu.vector_store %arg7[%c0_41, %c0_42, %c0_43, %c0_44], %70 {strides = array<i32>} : memref<1x1x16x256xf32, #tpu.memory_space<vmem>>, vector<1x1x16x256xf32>,
    } else {
    }
    return
  }
  func.func @transform_0(%arg0: i32, %arg1: i32) -> (i32, i32, i32) {
    %c0_i32 = arith.constant 0 : i32
    %c0_i32_0 = arith.constant 0 : i32
    %c0_i32_1 = arith.constant 0 : i32
    return %arg0, %c0_i32, %c0_i32_0 : i32, i32, i32
  }
  func.func @transform_1(%arg0: i32, %arg1: i32) -> (i32, i32) {
    %c0_i32 = arith.constant 0 : i32
    %c0_i32_0 = arith.constant 0 : i32
    %c0_i32_1 = arith.constant 0 : i32
    return %c0_i32, %c0_i32_0 : i32, i32
  }
  func.func @transform_2(%arg0: i32, %arg1: i32) -> (i32, i32) {
    %c0_i32 = arith.constant 0 : i32
    %c0_i32_0 = arith.constant 0 : i32
    %c0_i32_1 = arith.constant 0 : i32
    return %c0_i32, %c0_i32_0 : i32, i32
  }
  func.func @transform_3(%arg0: i32, %arg1: i32) -> (i32, i32, i32, i32) {
    %c0_i32 = arith.constant 0 : i32
    %c0_i32_0 = arith.constant 0 : i32
    %c0_i32_1 = arith.constant 0 : i32
    %c0_i32_2 = arith.constant 0 : i32
    return %arg1, %c0_i32, %c0_i32_0, %c0_i32_1 : i32, i32, i32, i32
  }
  func.func @transform_4(%arg0: i32, %arg1: i32) -> (i32, i32, i32) {
    %c0_i32 = arith.constant 0 : i32
    %c0_i32_0 = arith.constant 0 : i32
    %c0_i32_1 = arith.constant 0 : i32
    return %arg1, %c0_i32, %c0_i32_0 : i32, i32, i32
  }
  func.func @transform_5(%arg0: i32, %arg1: i32) -> (i32, i32, i32, i32) {
    %c0_i32 = arith.constant 0 : i32
    %c0_i32_0 = arith.constant 0 : i32
    %c0_i32_1 = arith.constant 0 : i32
    return %arg0, %arg1, %c0_i32, %c0_i32_0 : i32, i32, i32, i32
  }
}

</mosaic_0001>

<llo_original>
// kernel: _lambda_.1
$region0: #{_lambda_.1}
  #allocation0 [shape = 'u32[]', space=smem, size = 0x4, offset = 0x4, fixed_abs, tag = 'smem constant byte address 0x4 - core index']
  #allocation1 [shape = 'u32[144,128]{1,0:T(1,128)}', space=vmem, size = 0x12000, scoped, tag = 'internal scratch']
  #allocation2 [shape = 'f32[16,256]{1,0:T(8,128)}', space=vmem, size = 0x4000, scoped, tag = 'scratch operand']
  %s0 = inlined_call_operand.vmem [shape: f32[2,32,256], index: 0, kind: input, shape index: {}]
  %s1 = inlined_call_operand.vmem [shape: f32[16,32], index: 1, kind: input, shape index: {}]
  %s2 = inlined_call_operand.vmem [shape: f32[16,256], index: 2, kind: input, shape index: {}]
  %s3 = inlined_call_operand.vmem [shape: f32[3,9,16,256], index: 3, kind: input, shape index: {}]
  %s4 = inlined_call_operand.vmem [shape: f32[3,16,256], index: 4, kind: input, shape index: {}]
  %s5 = inlined_call_operand.vmem [shape: f32[2,3,16,256], index: 5, kind: output, shape index: {}]
  %s6 = sld [smem:[#allocation0]]
  $region69: #{_lambda_.1} parent=0
    _
  %s8 = ssub.s32 1, %s6
  %s9 = scalar_select 0, %s8, %s6
  loop: start=0, step=1, limit=8
  $region2: #{_lambda_.1} parent=0 // loop_pre_header
    _
  $region3: #{_lambda_.1} parent=0 // loop_header
    %s11 = sphi 0, %s15
    %p12 = scmp.ge.s32.totalorder %s11, 8
    %s18 = sphi 0, %s30
    %s19 = sphi 0, %s26
    %s20 = sphi 0, %s18
    %s21 = sphi 0, %s19
    %s22 = sphi 0, %s20
    %s23 = sphi 0, %s21
    %s33 = sphi 0, %s35
    %s36 = sphi 0, %s33
    %s37 = sphi 0, %s36
    %s53 = sphi 0, %s37
    %s57 = sphi 0, %s57
    %s59 = sphi 0, %s57
    %s60 = sphi 0, %s59
    %s74 = sphi 0, %s60
    %s78 = sphi 0, %s78
    %s80 = sphi 0, %s78
    %s81 = sphi 0, %s80
    %s95 = sphi 0, %s81
    %s101 = sphi 0, %s103
    %s104 = sphi 0, %s101
    %s105 = sphi 0, %s104
    %s121 = sphi 0, %s105
    %s127 = sphi 0, %s129
    %s130 = sphi 0, %s127
    %s131 = sphi 0, %s130
    %s147 = sphi 0, %s131
    %s155 = sphi 0, %s157
    %s158 = sphi 0, %s155
    %s159 = sphi 0, %s158
    %s175 = sphi 0, %s159
  $region4: #{_lambda_.1} parent=0 // loop_header_branch
    %14 = sbr.rel (%p12) target = $region8
  $region5: #{_lambda_.1} parent=0 // loop_body
    %s16 = ssub.s32 %s11, 1
    %s17 = ssub.s32 %s11, 2
    %s24 = sadd.s32 1, %s19
    %p25 = scmp.ge.s32.totalorder %s24, 3
    %s26 = scalar_select %p25, 0, %s24
    %s27 = sadd.s32 1, %s18
    %s28 = scalar_select %p25, %s27, %s18
    %p29 = scmp.ge.s32.totalorder %s28, 2
    %s30 = scalar_select %p29, 0, %s28
    %s31 = ssub.s32 %s18, %s30
    %p32 = scmp.eq.s32.totalorder %s31, 0
    %s34 = sadd.s32 %s33, 1
    %s35 = scalar_select %p32, %s33, %s34
    %p38 = pneg %p32
    %p39 = scmp.eq.s32.totalorder %s11, 5
    %p40 = por %p38, %p39
    %p41 = scmp.ne.s32.totalorder %s33, %s36
    %p42 = scmp.eq.s32.totalorder %s11, 0
    %p43 = por %p41, %p42
    %p44 = scmp.ne.s32.totalorder %s33, %s36
    %p45 = scmp.eq.s32.totalorder %s16, 5
    %p46 = por %p44, %p45
    %p47 = scmp.ne.s32.totalorder %s36, %s37
    %p48 = scmp.eq.s32.totalorder %s16, 0
    %p49 = por %p47, %p48
    %p50 = scmp.ne.s32.totalorder %s36, %s37
    %p51 = scmp.eq.s32.totalorder %s17, 5
    %p52 = por %p50, %p51
    %p54 = scmp.ne.s32.totalorder %s37, %s53
    %p55 = scmp.eq.s32.totalorder %s17, 0
    %p56 = por %p54, %p55
    %s58 = sadd.s32 %s57, 1
    %p61 = scmp.eq.s32.totalorder %s11, 5
    %p62 = scmp.ne.s32.totalorder %s57, %s59
    %p63 = scmp.eq.s32.totalorder %s11, 0
    %p64 = por %p62, %p63
    %p65 = scmp.ne.s32.totalorder %s57, %s59
    %p66 = scmp.eq.s32.totalorder %s16, 5
    %p67 = por %p65, %p66
    %p68 = scmp.ne.s32.totalorder %s59, %s60
    %p69 = scmp.eq.s32.totalorder %s16, 0
    %p70 = por %p68, %p69
    %p71 = scmp.ne.s32.totalorder %s59, %s60
    %p72 = scmp.eq.s32.totalorder %s17, 5
    %p73 = por %p71, %p72
    %p75 = scmp.ne.s32.totalorder %s60, %s74
    %p76 = scmp.eq.s32.totalorder %s17, 0
    %p77 = por %p75, %p76
    %s79 = sadd.s32 %s78, 1
    %p82 = scmp.eq.s32.totalorder %s11, 5
    %p83 = scmp.ne.s32.totalorder %s78, %s80
    %p84 = scmp.eq.s32.totalorder %s11, 0
    %p85 = por %p83, %p84
    %p86 = scmp.ne.s32.totalorder %s78, %s80
    %p87 = scmp.eq.s32.totalorder %s16, 5
    %p88 = por %p86, %p87
    %p89 = scmp.ne.s32.totalorder %s80, %s81
    %p90 = scmp.eq.s32.totalorder %s16, 0
    %p91 = por %p89, %p90
    %p92 = scmp.ne.s32.totalorder %s80, %s81
    %p93 = scmp.eq.s32.totalorder %s17, 5
    %p94 = por %p92, %p93
    %p96 = scmp.ne.s32.totalorder %s81, %s95
    %p97 = scmp.eq.s32.totalorder %s17, 0
    %p98 = por %p96, %p97
    %s99 = ssub.s32 %s19, %s26
    %p100 = scmp.eq.s32.totalorder %s99, 0
    %s102 = sadd.s32 %s101, 1
    %s103 = scalar_select %p100, %s101, %s102
    %p106 = pneg %p100
    %p107 = scmp.eq.s32.totalorder %s11, 5
    %p108 = por %p106, %p107
    %p109 = scmp.ne.s32.totalorder %s101, %s104
    %p110 = scmp.eq.s32.totalorder %s11, 0
    %p111 = por %p109, %p110
    %p112 = scmp.ne.s32.totalorder %s101, %s104
    %p113 = scmp.eq.s32.totalorder %s16, 5
    %p114 = por %p112, %p113
    %p115 = scmp.ne.s32.totalorder %s104, %s105
    %p116 = scmp.eq.s32.totalorder %s16, 0
    %p117 = por %p115, %p116
    %p118 = scmp.ne.s32.totalorder %s104, %s105
    %p119 = scmp.eq.s32.totalorder %s17, 5
    %p120 = por %p118, %p119
    %p122 = scmp.ne.s32.totalorder %s105, %s121
    %p123 = scmp.eq.s32.totalorder %s17, 0
    %p124 = por %p122, %p123
    %s125 = ssub.s32 %s19, %s26
    %p126 = scmp.eq.s32.totalorder %s125, 0
    %s128 = sadd.s32 %s127, 1
    %s129 = scalar_select %p126, %s127, %s128
    %p132 = pneg %p126
    %p133 = scmp.eq.s32.totalorder %s11, 5
    %p134 = por %p132, %p133
    %p135 = scmp.ne.s32.totalorder %s127, %s130
    %p136 = scmp.eq.s32.totalorder %s11, 0
    %p137 = por %p135, %p136
    %p138 = scmp.ne.s32.totalorder %s127, %s130
    %p139 = scmp.eq.s32.totalorder %s16, 5
    %p140 = por %p138, %p139
    %p141 = scmp.ne.s32.totalorder %s130, %s131
    %p142 = scmp.eq.s32.totalorder %s16, 0
    %p143 = por %p141, %p142
    %p144 = scmp.ne.s32.totalorder %s130, %s131
    %p145 = scmp.eq.s32.totalorder %s17, 5
    %p146 = por %p144, %p145
    %p148 = scmp.ne.s32.totalorder %s131, %s147
    %p149 = scmp.eq.s32.totalorder %s17, 0
    %p150 = por %p148, %p149
    %s151 = ssub.s32 %s18, %s30
    %s152 = ssub.s32 %s19, %s26
    %s153 = sor.u32 %s151, %s152
    %p154 = scmp.eq.s32.totalorder %s153, 0
    %s156 = sadd.s32 %s155, 1
    %s157 = scalar_select %p154, %s155, %s156
    %p160 = pneg %p154
    %p161 = scmp.eq.s32.totalorder %s11, 5
    %p162 = por %p160, %p161
    %p163 = scmp.ne.s32.totalorder %s155, %s158
    %p164 = scmp.eq.s32.totalorder %s11, 0
    %p165 = por %p163, %p164
    %p166 = scmp.ne.s32.totalorder %s155, %s158
    %p167 = scmp.eq.s32.totalorder %s16, 5
    %p168 = por %p166, %p167
    %p169 = scmp.ne.s32.totalorder %s158, %s159
    %p170 = scmp.eq.s32.totalorder %s16, 0
    %p171 = por %p169, %p170
    %p172 = scmp.ne.s32.totalorder %s158, %s159
    %p173 = scmp.eq.s32.totalorder %s17, 5
    %p174 = por %p172, %p173
    %p176 = scmp.ne.s32.totalorder %s159, %s175
    %p177 = scmp.eq.s32.totalorder %s17, 0
    %p178 = por %p176, %p177
    %p179 = scmp.le.s32.totalorder 1, %s11
    %p180 = scmp.lt.s32.totalorder %s11, 7
    %p181 = pnand %p179, %p180
    %p182 = pneg %p181
    // Predicated region
    $region9: #{_lambda_.1} parent=5 // pred_check
      _
    $region10: #{_lambda_.1} parent=5 // pred_check_branch
      %184 = sbr.rel (%p181) target = $region12
    $region11: #{_lambda_.1} parent=5 // pred_region
      %s185 = ssub.s32 %s11, 1
      // Predicated region
      $region13: #{_lambda_.1} parent=11 // pred_check
        %p186 = pneg %p70
      $region14: #{_lambda_.1} parent=11 // pred_check_branch
        %188 = sbr.rel (%p186) target = $region16
      $region15: #{_lambda_.1} parent=11 // pred_region
        _
      $region16: #{_lambda_.1} parent=11 // pred_fallthru
        _
      // Predicated region
      $region17: #{_lambda_.1} parent=11 // pred_check
        %p189 = pneg %p91
      $region18: #{_lambda_.1} parent=11 // pred_check_branch
        %191 = sbr.rel (%p189) target = $region20
      $region19: #{_lambda_.1} parent=11 // pred_region
        _
      $region20: #{_lambda_.1} parent=11 // pred_fallthru
        _
    $region12: #{_lambda_.1} parent=5 // pred_fallthru
      _
    %p192 = scmp.lt.s32.totalorder %s11, 6
    // Predicated region
    $region21: #{_lambda_.1} parent=5 // pred_check
      %p193 = pneg %p192
    $region22: #{_lambda_.1} parent=5 // pred_check_branch
      %195 = sbr.rel (%p193) target = $region24
    $region23: #{_lambda_.1} parent=5 // pred_region
      // Predicated region
      $region25: #{_lambda_.1} parent=23 // pred_check
        %p196 = pneg %p43
      $region26: #{_lambda_.1} parent=23 // pred_check_branch
        %198 = sbr.rel (%p196) target = $region28
      $region27: #{_lambda_.1} parent=23 // pred_region
        %p199 = scmp.lt.s32.totalorder %s18, 1
        %s200 = scalar_select %p199, %s18, 1
        %s201 = smul.addr %s200, 8
        %s202 = smul.addr %s201, 8
        %s203 = scalar_lea.vmem %s0, %s202
      $region28: #{_lambda_.1} parent=23 // pred_fallthru
        _
      // Predicated region
      $region29: #{_lambda_.1} parent=23 // pred_check
        %p204 = pneg %p111
      $region30: #{_lambda_.1} parent=23 // pred_check_branch
        %206 = sbr.rel (%p204) target = $region32
      $region31: #{_lambda_.1} parent=23 // pred_region
        %p207 = scmp.lt.s32.totalorder %s19, 2
        %s208 = scalar_select %p207, %s19, 2
        %s209 = smul.addr %s208, 36
        %s210 = smul.addr %s209, 8
        %s211 = scalar_lea.vmem %s3, %s210
      $region32: #{_lambda_.1} parent=23 // pred_fallthru
        _
      // Predicated region
      $region33: #{_lambda_.1} parent=23 // pred_check
        %p212 = pneg %p137
      $region34: #{_lambda_.1} parent=23 // pred_check_branch
        %214 = sbr.rel (%p212) target = $region36
      $region35: #{_lambda_.1} parent=23 // pred_region
        %p215 = scmp.lt.s32.totalorder %s19, 2
        %s216 = scalar_select %p215, %s19, 2
        %s217 = smul.addr %s216, 4
        %s218 = smul.addr %s217, 8
        %s219 = scalar_lea.vmem %s4, %s218
      $region36: #{_lambda_.1} parent=23 // pred_fallthru
        _
    $region24: #{_lambda_.1} parent=5 // pred_fallthru
      _
    %p220 = scmp.le.s32.totalorder 1, %s11
    %p221 = scmp.lt.s32.totalorder %s11, 7
    %p222 = pnand %p220, %p221
    %p223 = pneg %p222
    // Predicated region
    $region37: #{_lambda_.1} parent=5 // pred_check
      _
    $region38: #{_lambda_.1} parent=5 // pred_check_branch
      %225 = sbr.rel (%p222) target = $region40
    $region39: #{_lambda_.1} parent=5 // pred_region
      %s226 = ssub.s32 %s11, 1
      %p227 = scmp.lt.s32.totalorder %s20, 1
      %s228 = scalar_select %p227, %s20, 1
      %s229 = smul.addr %s228, 8
      %s230 = smul.addr %s229, 8
      %s231 = scalar_lea.vmem %s0, %s230
      %p232 = pneg %p49
      %p233 = pneg %p46
      %p234 = pneg %p70
      %p235 = pneg %p67
      %p236 = pneg %p91
      %p237 = pneg %p88
      %p238 = scmp.lt.s32.totalorder %s21, 2
      %s239 = scalar_select %p238, %s21, 2
      %s240 = smul.addr %s239, 36
      %s241 = smul.addr %s240, 8
      %s242 = scalar_lea.vmem %s3, %s241
      %p243 = pneg %p117
      %p244 = pneg %p114
      %p245 = scmp.lt.s32.totalorder %s21, 2
      %s246 = scalar_select %p245, %s21, 2
      %s247 = smul.addr %s246, 4
      %s248 = smul.addr %s247, 8
      %s249 = scalar_lea.vmem %s4, %s248
      %p250 = pneg %p143
      %p251 = pneg %p140
      %p252 = pneg %p171
      %p253 = pneg %p168
      %p254 = scmp.lt.s32.totalorder %s20, 1
      %s255 = scalar_select %p254, %s20, 1
      %p256 = scmp.lt.s32.totalorder %s21, 2
      %s257 = scalar_select %p256, %s21, 2
      %s258 = smul.addr %s257, 4
      %s259 = smul.addr %s255, 12
      %s260 = sadd.s32 %s258, %s259
      %s261 = smul.addr %s260, 8
      %s262 = scalar_lea.vmem %s5, %s261
      %p263 = scmp.lt.s32.totalorder %s20, 1
      %s264 = scalar_select %p263, %s20, 1
      %s265 = smul.addr %s264, 8
      %s266 = smul.addr %s265, 8
      %s267 = scalar_lea.vmem %s0, %s266
      %p268 = scmp.lt.s32.totalorder %s21, 2
      %s269 = scalar_select %p268, %s21, 2
      %s270 = smul.addr %s269, 36
      %s271 = smul.addr %s270, 8
      %s272 = scalar_lea.vmem %s3, %s271
      %p273 = scmp.lt.s32.totalorder %s21, 2
      %s274 = scalar_select %p273, %s21, 2
      %s275 = smul.addr %s274, 4
      %s276 = smul.addr %s275, 8
      %s277 = scalar_lea.vmem %s4, %s276
      %p278 = scmp.lt.s32.totalorder %s20, 1
      %s279 = scalar_select %p278, %s20, 1
      %p280 = scmp.lt.s32.totalorder %s21, 2
      %s281 = scalar_select %p280, %s21, 2
      %s282 = smul.addr %s281, 4
      %s283 = smul.addr %s279, 12
      %s284 = sadd.s32 %s282, %s283
      %s285 = smul.addr %s284, 8
      %s286 = scalar_lea.vmem %s5, %s285
      %p287 = scmp.eq.s32.totalorder %s21, 0
      // Predicated region
      $region41: #{_lambda_.1} parent=39 // pred_check
        %p288 = pneg %p287
      $region42: #{_lambda_.1} parent=39 // pred_check_branch
        %290 = sbr.rel (%p288) target = $region44
      $region43: #{_lambda_.1} parent=39 // pred_region
        %v291 = vld [vmem:[%s1] sm:$0xff]
        %v292 = vld [vmem:[%s1 + $0x8] sm:$0xff]
        %v293 = vld [vmem:[%s267] sm:$0xff]
        %v294 = vld [vmem:[%s267 + $0x8] sm:$0xff]
        %v295 = vld [vmem:[%s267 + $0x10] sm:$0xff]
        %v296 = vld [vmem:[%s267 + $0x18] sm:$0xff]
        %v297 = vld [vmem:[%s267 + $0x20] sm:$0xff]
        %v298 = vld [vmem:[%s267 + $0x28] sm:$0xff]
        %v299 = vld [vmem:[%s267 + $0x30] sm:$0xff]
        %v300 = vld [vmem:[%s267 + $0x38] sm:$0xff]
        %v301 = vld [vmem:[%s2] sm:$0xff]
        %v302 = vld [vmem:[%s2 + $0x8] sm:$0xff]
        %v303 = vld [vmem:[%s2 + $0x10] sm:$0xff]
        %v304 = vld [vmem:[%s2 + $0x18] sm:$0xff]
        %vm305 = vcmask 261120
        %v307 = vsel %vm305, %v291, 0
        %v310 = vsel %vm305, %v292, 0
        %312 = vmatprep.subr.mxu0 %v294
        %313 = vmatpush1.msra.mxu0 %v293
        %314 = vmatprep.subr.mxu0 %v296
        %315 = vmatpush1.msra.mxu0 %v295
        %316 = vmatprep.subr.mxu0 %v298
        %317 = vmatpush1.msra.mxu0 %v297
        %318 = vmatprep.subr.mxu0 %v300
        %319 = vmatpush1.msra.mxu0 %v299
        %320 = vmatprep.subr.mxu0 0.0
        %321 = vmatpush1.msra.mxu0 0.0
        %322 = vmatprep.subr.mxu0 0.0
        %323 = vmatpush1.msra.mxu0 0.0
        %324 = vmatprep.subr.mxu0 0.0
        %325 = vmatpush1.msra.mxu0 0.0
        %326 = vmatprep.subr.mxu0 0.0
        %327 = vmatpush1.msra.mxu0 0.0
        %328 = vmatprep.subr.mxu0 0.0
        %329 = vmatpush1.msra.mxu0 0.0
        %330 = vmatprep.subr.mxu0 0.0
        %331 = vmatpush1.msra.mxu0 0.0
        %332 = vmatprep.subr.mxu0 0.0
        %333 = vmatpush1.msra.mxu0 0.0
        %334 = vmatprep.subr.mxu0 0.0
        %335 = vmatpush1.msra.mxu0 0.0
        %336 = vmatprep.subr.mxu0 0.0
        %337 = vmatpush1.msra.mxu0 0.0
        %338 = vmatprep.subr.mxu0 0.0
        %339 = vmatpush1.msra.mxu0 0.0
        %340 = vmatprep.subr.mxu0 0.0
        %341 = vmatpush1.msra.mxu0 0.0
        %342 = vmatprep.subr.mxu0 0.0
        %343 = vmatpush1.msra.mxu0 0.0
        %344 = vmatprep.subr.mxu0 0.0
        %345 = vmatpush1.msra.mxu0 0.0
        %346 = vmatprep.subr.mxu0 0.0
        %347 = vmatpush1.msra.mxu0 0.0
        %348 = vmatprep.subr.mxu0 0.0
        %349 = vmatpush1.msra.mxu0 0.0
        %350 = vmatprep.subr.mxu0 0.0
        %351 = vmatpush1.msra.mxu0 0.0
        %352 = vmatprep.subr.mxu0 0.0
        %353 = vmatpush1.msra.mxu0 0.0
        %354 = vmatprep.subr.mxu0 0.0
        %355 = vmatpush1.msra.mxu0 0.0
        %356 = vmatprep.subr.mxu0 0.0
        %357 = vmatpush1.msra.mxu0 0.0
        %358 = vmatprep.subr.mxu0 0.0
        %359 = vmatpush1.msra.mxu0 0.0
        %360 = vmatprep.subr.mxu0 0.0
        %361 = vmatpush1.msra.mxu0 0.0
        %362 = vmatprep.subr.mxu0 0.0
        %363 = vmatpush1.msra.mxu0 0.0
        %364 = vmatprep.subr.mxu0 0.0
        %365 = vmatpush1.msra.mxu0 0.0
        %366 = vmatprep.subr.mxu0 0.0
        %367 = vmatpush1.msra.mxu0 0.0
        %368 = vmatprep.subr.mxu0 0.0
        %369 = vmatpush1.msra.mxu0 0.0
        %370 = vmatprep.subr.mxu0 0.0
        %371 = vmatpush1.msra.mxu0 0.0
        %372 = vmatprep.subr.mxu0 0.0
        %373 = vmatpush1.msra.mxu0 0.0
        %374 = vmatprep.subr.mxu0 0.0
        %375 = vmatpush1.msra.mxu0 0.0
        %376 = vmatprep.mubr.f32.mxu0 0.0
        %377 = vmatmul.mubr.f32.gmra.mrb[0].mxu0 %v307
        %v378 = vpop.f32.mrb[0].mxu0
        %v379 = vadd.f32 %v301, %v378
        %v380 = vpop.f32.mrb[0].mxu0
        %v381 = vadd.f32 %v302, %v380
        %382 = vmatprep.mubr.f32.mxu0 0.0
        %383 = vmatmul.mubr.f32.gmra.mrb[0].mxu0 %v310
        %v384 = vpop.f32.mrb[0].mxu0
        %v385 = vadd.f32 %v303, %v384
        %v386 = vpop.f32.mrb[0].mxu0
        %v387 = vadd.f32 %v304, %v386
        %388 = vdwg.mxu0
        %v389 = vmul.f32 %v379, 0.5
        %v390 = vmul.f32 %v381, 0.5
        %v391 = vmul.f32 %v385, 0.5
        %v392 = vmul.f32 %v387, 0.5
        %v393 = vmul.f32 %v379, 0.70710677
        %v394 = vmul.f32 %v381, 0.70710677
        %v395 = vmul.f32 %v385, 0.70710677
        %v396 = vmul.f32 %v387, 0.70710677
        %v397 = verf.f32.pop %v393
        %v398 = verf.f32.pop %v394
        %v399 = verf.f32.pop %v395
        %v400 = verf.f32.pop %v396
        %v401 = vadd.f32 %v397, 1.0
        %v402 = vadd.f32 %v398, 1.0
        %v403 = vadd.f32 %v399, 1.0
        %v404 = vadd.f32 %v400, 1.0
        %v405 = vmul.f32 %v389, %v401
        %v406 = vmul.f32 %v390, %v402
        %v407 = vmul.f32 %v391, %v403
        %v408 = vmul.f32 %v392, %v404
        %409 = vst [vmem:[#allocation2] sm:$0xff] %v405
        %410 = vst [vmem:[#allocation2 + $0x8] sm:$0xff] %v406
        %411 = vst [vmem:[#allocation2 + $0x10] sm:$0xff] %v407
        %412 = vst [vmem:[#allocation2 + $0x18] sm:$0xff] %v408
      $region44: #{_lambda_.1} parent=39 // pred_fallthru
        _
      %v413 = vld [vmem:[#allocation2] sm:$0xff]
      %v414 = vld [vmem:[#allocation2 + $0x8] sm:$0xff]
      %v415 = vld [vmem:[#allocation2 + $0x10] sm:$0xff]
      %v416 = vld [vmem:[#allocation2 + $0x18] sm:$0xff]
      %v417 = vld [vmem:[%s277] sm:$0xff]
      %v418 = vld [vmem:[%s277 + $0x8] sm:$0xff]
      %v419 = vld [vmem:[%s277 + $0x10] sm:$0xff]
      %v420 = vld [vmem:[%s277 + $0x18] sm:$0xff]
      // Predicated region
      $region45: #{_lambda_.1} parent=39 // pred_check
        %p421 = pneg %p287
      $region46: #{_lambda_.1} parent=39 // pred_check_branch
        %423 = sbr.rel (%p421) target = $region48
      $region47: #{_lambda_.1} parent=39 // pred_region
        %424 = vrot.lane.b32.xlu0 %v413, 17
        %v425 = vpop.permute.xlu0 %424
        %426 = vrot.lane.b32.xlu0 %v415, 17
        %v427 = vpop.permute.xlu0 %426
        %428 = vrot.lane.b32.xlu0 %v414, 17
        %v429 = vpop.permute.xlu0 %428
        %430 = vrot.lane.b32.xlu0 %v416, 17
        %v431 = vpop.permute.xlu0 %430
        %v432 = vlaneseq
        %v433 = vand.u32 %v432, 127
        %vm434 = vcmp.lt.s32.totalorder %v433, 17
        %v435 = vsel %vm434, %v425, %v429
        %v436 = vsel %vm434, %v427, %v431
        %v437 = vsel %vm434, %v429, %v425
        %v438 = vsel %vm434, %v431, %v427
        %v439 = vld [vmem:[%s272] sm:$0xff]
        %v440 = vld [vmem:[%s272 + $0x8] sm:$0xff]
        %v441 = vld [vmem:[%s272 + $0x10] sm:$0xff]
        %v442 = vld [vmem:[%s272 + $0x18] sm:$0xff]
        %v443 = vmul.f32 %v437, %v439
        %v444 = vmul.f32 %v435, %v440
        %v445 = vmul.f32 %v438, %v441
        %v446 = vmul.f32 %v436, %v442
        %447 = vrot.lane.b32.xlu0 %v413, 16
        %v448 = vpop.permute.xlu0 %447
        %449 = vrot.lane.b32.xlu0 %v415, 16
        %v450 = vpop.permute.xlu0 %449
        %451 = vrot.lane.b32.xlu0 %v414, 16
        %v452 = vpop.permute.xlu0 %451
        %453 = vrot.lane.b32.xlu0 %v416, 16
        %v454 = vpop.permute.xlu0 %453
        %vm455 = vcmp.lt.s32.totalorder %v433, 16
        %v456 = vsel %vm455, %v448, %v452
        %v457 = vsel %vm455, %v450, %v454
        %v458 = vsel %vm455, %v452, %v448
        %v459 = vsel %vm455, %v454, %v450
        %s460 = scalar_lea.vmem %s272, 32
        %v461 = vld [vmem:[%s460] sm:$0xff]
        %v462 = vld [vmem:[%s460 + $0x8] sm:$0xff]
        %v463 = vld [vmem:[%s460 + $0x10] sm:$0xff]
        %v464 = vld [vmem:[%s460 + $0x18] sm:$0xff]
        %v465 = vmul.f32 %v458, %v461
        %v466 = vmul.f32 %v456, %v462
        %v467 = vmul.f32 %v459, %v463
        %v468 = vmul.f32 %v457, %v464
        %v469 = vadd.f32 %v443, %v465
        %v470 = vadd.f32 %v444, %v466
        %v471 = vadd.f32 %v445, %v467
        %v472 = vadd.f32 %v446, %v468
        %473 = vrot.lane.b32.xlu0 %v413, 15
        %v474 = vpop.permute.xlu0 %473
        %475 = vrot.lane.b32.xlu0 %v415, 15
        %v476 = vpop.permute.xlu0 %475
        %477 = vrot.lane.b32.xlu0 %v414, 15
        %v478 = vpop.permute.xlu0 %477
        %479 = vrot.lane.b32.xlu0 %v416, 15
        %v480 = vpop.permute.xlu0 %479
        %vm481 = vcmp.lt.s32.totalorder %v433, 15
        %v482 = vsel %vm481, %v474, %v478
        %v483 = vsel %vm481, %v476, %v480
        %v484 = vsel %vm481, %v478, %v474
        %v485 = vsel %vm481, %v480, %v476
        %s486 = scalar_lea.vmem %s272, 64
        %v487 = vld [vmem:[%s486] sm:$0xff]
        %v488 = vld [vmem:[%s486 + $0x8] sm:$0xff]
        %v489 = vld [vmem:[%s486 + $0x10] sm:$0xff]
        %v490 = vld [vmem:[%s486 + $0x18] sm:$0xff]
        %v491 = vmul.f32 %v484, %v487
        %v492 = vmul.f32 %v482, %v488
        %v493 = vmul.f32 %v485, %v489
        %v494 = vmul.f32 %v483, %v490
        %v495 = vadd.f32 %v469, %v491
        %v496 = vadd.f32 %v470, %v492
        %v497 = vadd.f32 %v471, %v493
        %v498 = vadd.f32 %v472, %v494
        %499 = vrot.lane.b32.xlu0 %v413, 1
        %v500 = vpop.permute.xlu0 %499
        %501 = vrot.lane.b32.xlu0 %v415, 1
        %v502 = vpop.permute.xlu0 %501
        %503 = vrot.lane.b32.xlu0 %v414, 1
        %v504 = vpop.permute.xlu0 %503
        %505 = vrot.lane.b32.xlu0 %v416, 1
        %v506 = vpop.permute.xlu0 %505
        %vm507 = vcmp.lt.s32.totalorder %v433, 1
        %v508 = vsel %vm507, %v500, %v504
        %v509 = vsel %vm507, %v502, %v506
        %v510 = vsel %vm507, %v504, %v500
        %v511 = vsel %vm507, %v506, %v502
        %s512 = scalar_lea.vmem %s272, 96
        %v513 = vld [vmem:[%s512] sm:$0xff]
        %v514 = vld [vmem:[%s512 + $0x8] sm:$0xff]
        %v515 = vld [vmem:[%s512 + $0x10] sm:$0xff]
        %v516 = vld [vmem:[%s512 + $0x18] sm:$0xff]
        %v517 = vmul.f32 %v510, %v513
        %v518 = vmul.f32 %v508, %v514
        %v519 = vmul.f32 %v511, %v515
        %v520 = vmul.f32 %v509, %v516
        %s521 = scalar_lea.vmem %s272, 128
        %v522 = vld [vmem:[%s521] sm:$0xff]
        %v523 = vld [vmem:[%s521 + $0x8] sm:$0xff]
        %v524 = vld [vmem:[%s521 + $0x10] sm:$0xff]
        %v525 = vld [vmem:[%s521 + $0x18] sm:$0xff]
        %v526 = vmul.f32 %v413, %v522
        %v527 = vmul.f32 %v414, %v523
        %v528 = vmul.f32 %v415, %v524
        %v529 = vmul.f32 %v416, %v525
        %v530 = vadd.f32 %v517, %v526
        %v531 = vadd.f32 %v518, %v527
        %v532 = vadd.f32 %v519, %v528
        %v533 = vadd.f32 %v520, %v529
        %534 = vrot.lane.b32.xlu0 %v413, 127
        %v535 = vpop.permute.xlu0 %534
        %536 = vrot.lane.b32.xlu0 %v415, 127
        %v537 = vpop.permute.xlu0 %536
        %538 = vrot.lane.b32.xlu0 %v414, 127
        %v539 = vpop.permute.xlu0 %538
        %540 = vrot.lane.b32.xlu0 %v416, 127
        %v541 = vpop.permute.xlu0 %540
        %vm542 = vcmp.lt.s32.totalorder %v433, 127
        %v543 = vsel %vm542, %v535, %v539
        %v544 = vsel %vm542, %v537, %v541
        %v545 = vsel %vm542, %v539, %v535
        %v546 = vsel %vm542, %v541, %v537
        %s547 = scalar_lea.vmem %s272, 160
        %v548 = vld [vmem:[%s547] sm:$0xff]
        %v549 = vld [vmem:[%s547 + $0x8] sm:$0xff]
        %v550 = vld [vmem:[%s547 + $0x10] sm:$0xff]
        %v551 = vld [vmem:[%s547 + $0x18] sm:$0xff]
        %v552 = vmul.f32 %v543, %v548
        %v553 = vmul.f32 %v545, %v549
        %v554 = vmul.f32 %v544, %v550
        %v555 = vmul.f32 %v546, %v551
        %v556 = vadd.f32 %v530, %v552
        %v557 = vadd.f32 %v531, %v553
        %v558 = vadd.f32 %v532, %v554
        %v559 = vadd.f32 %v533, %v555
        %560 = vrot.lane.b32.xlu0 %v413, 113
        %v561 = vpop.permute.xlu0 %560
        %562 = vrot.lane.b32.xlu0 %v415, 113
        %v563 = vpop.permute.xlu0 %562
        %564 = vrot.lane.b32.xlu0 %v414, 113
        %v565 = vpop.permute.xlu0 %564
        %566 = vrot.lane.b32.xlu0 %v416, 113
        %v567 = vpop.permute.xlu0 %566
        %vm568 = vcmp.lt.s32.totalorder %v433, 113
        %v569 = vsel %vm568, %v561, %v565
        %v570 = vsel %vm568, %v563, %v567
        %v571 = vsel %vm568, %v565, %v561
        %v572 = vsel %vm568, %v567, %v563
        %s573 = scalar_lea.vmem %s272, 192
        %v574 = vld [vmem:[%s573] sm:$0xff]
        %v575 = vld [vmem:[%s573 + $0x8] sm:$0xff]
        %v576 = vld [vmem:[%s573 + $0x10] sm:$0xff]
        %v577 = vld [vmem:[%s573 + $0x18] sm:$0xff]
        %v578 = vmul.f32 %v569, %v574
        %v579 = vmul.f32 %v571, %v575
        %v580 = vmul.f32 %v570, %v576
        %v581 = vmul.f32 %v572, %v577
        %582 = vrot.lane.b32.xlu0 %v413, 112
        %v583 = vpop.permute.xlu0 %582
        %584 = vrot.lane.b32.xlu0 %v415, 112
        %v585 = vpop.permute.xlu0 %584
        %586 = vrot.lane.b32.xlu0 %v414, 112
        %v587 = vpop.permute.xlu0 %586
        %588 = vrot.lane.b32.xlu0 %v416, 112
        %v589 = vpop.permute.xlu0 %588
        %vm590 = vcmp.lt.s32.totalorder %v433, 112
        %v591 = vsel %vm590, %v583, %v587
        %v592 = vsel %vm590, %v585, %v589
        %v593 = vsel %vm590, %v587, %v583
        %v594 = vsel %vm590, %v589, %v585
        %s595 = scalar_lea.vmem %s272, 224
        %v596 = vld [vmem:[%s595] sm:$0xff]
        %v597 = vld [vmem:[%s595 + $0x8] sm:$0xff]
        %v598 = vld [vmem:[%s595 + $0x10] sm:$0xff]
        %v599 = vld [vmem:[%s595 + $0x18] sm:$0xff]
        %v600 = vmul.f32 %v591, %v596
        %v601 = vmul.f32 %v593, %v597
        %v602 = vmul.f32 %v592, %v598
        %v603 = vmul.f32 %v594, %v599
        %v604 = vadd.f32 %v578, %v600
        %v605 = vadd.f32 %v579, %v601
        %v606 = vadd.f32 %v580, %v602
        %v607 = vadd.f32 %v581, %v603
        %608 = vrot.lane.b32.xlu0 %v413, 111
        %v609 = vpop.permute.xlu0 %608
        %610 = vrot.lane.b32.xlu0 %v415, 111
        %v611 = vpop.permute.xlu0 %610
        %612 = vrot.lane.b32.xlu0 %v414, 111
        %v613 = vpop.permute.xlu0 %612
        %614 = vrot.lane.b32.xlu0 %v416, 111
        %v615 = vpop.permute.xlu0 %614
        %vm616 = vcmp.lt.s32.totalorder %v433, 111
        %v617 = vsel %vm616, %v609, %v613
        %v618 = vsel %vm616, %v611, %v615
        %v619 = vsel %vm616, %v613, %v609
        %v620 = vsel %vm616, %v615, %v611
        %s621 = scalar_lea.vmem %s272, 256
        %v622 = vld [vmem:[%s621] sm:$0xff]
        %v623 = vld [vmem:[%s621 + $0x8] sm:$0xff]
        %v624 = vld [vmem:[%s621 + $0x10] sm:$0xff]
        %v625 = vld [vmem:[%s621 + $0x18] sm:$0xff]
        %v626 = vmul.f32 %v617, %v622
        %v627 = vmul.f32 %v619, %v623
        %v628 = vmul.f32 %v618, %v624
        %v629 = vmul.f32 %v620, %v625
        %v630 = vadd.f32 %v604, %v626
        %v631 = vadd.f32 %v605, %v627
        %v632 = vadd.f32 %v606, %v628
        %v633 = vadd.f32 %v607, %v629
        %v634 = vadd.f32 %v495, %v556
        %v635 = vadd.f32 %v496, %v557
        %v636 = vadd.f32 %v497, %v558
        %v637 = vadd.f32 %v498, %v559
        %v638 = vadd.f32 %v630, %v417
        %v639 = vadd.f32 %v631, %v418
        %v640 = vadd.f32 %v632, %v419
        %v641 = vadd.f32 %v633, %v420
        %v642 = vadd.f32 %v634, %v638
        %v643 = vadd.f32 %v635, %v639
        %v644 = vadd.f32 %v636, %v640
        %v645 = vadd.f32 %v637, %v641
        %v646 = vmul.f32 %v642, 0.5
        %v647 = vmul.f32 %v643, 0.5
        %v648 = vmul.f32 %v644, 0.5
        %v649 = vmul.f32 %v645, 0.5
        %v650 = vmul.f32 %v642, 0.70710677
        %v651 = vmul.f32 %v643, 0.70710677
        %v652 = vmul.f32 %v644, 0.70710677
        %v653 = vmul.f32 %v645, 0.70710677
        %v654 = verf.f32.pop %v650
        %v655 = verf.f32.pop %v651
        %v656 = verf.f32.pop %v652
        %v657 = verf.f32.pop %v653
        %v658 = vadd.f32 %v654, 1.0
        %v659 = vadd.f32 %v655, 1.0
        %v660 = vadd.f32 %v656, 1.0
        %v661 = vadd.f32 %v657, 1.0
        %v662 = vmul.f32 %v646, %v658
        %v663 = vmul.f32 %v647, %v659
        %v664 = vmul.f32 %v648, %v660
        %v665 = vmul.f32 %v649, %v661
        %666 = vst [vmem:[#allocation2] sm:$0xff] %v662
        %667 = vst [vmem:[#allocation2 + $0x8] sm:$0xff] %v663
        %668 = vst [vmem:[#allocation2 + $0x10] sm:$0xff] %v664
        %669 = vst [vmem:[#allocation2 + $0x18] sm:$0xff] %v665
        %670 = vst [vmem:[%s286] sm:$0xff] %v662
        %671 = vst [vmem:[%s286 + $0x8] sm:$0xff] %v663
        %672 = vst [vmem:[%s286 + $0x10] sm:$0xff] %v664
        %673 = vst [vmem:[%s286 + $0x18] sm:$0xff] %v665
      $region48: #{_lambda_.1} parent=39 // pred_fallthru
        _
      %p674 = scmp.eq.s32.totalorder %s21, 1
      // Predicated region
      $region49: #{_lambda_.1} parent=39 // pred_check
        %p675 = pneg %p674
      $region50: #{_lambda_.1} parent=39 // pred_check_branch
        %677 = sbr.rel (%p675) target = $region52
      $region51: #{_lambda_.1} parent=39 // pred_region
        %678 = vrot.lane.b32.xlu0 %v413, 34
        %v679 = vpop.permute.xlu0 %678
        %680 = vrot.lane.b32.xlu0 %v415, 34
        %v681 = vpop.permute.xlu0 %680
        %682 = vrot.lane.b32.xlu0 %v414, 34
        %v683 = vpop.permute.xlu0 %682
        %684 = vrot.lane.b32.xlu0 %v416, 34
        %v685 = vpop.permute.xlu0 %684
        %v686 = vlaneseq
        %v687 = vand.u32 %v686, 127
        %vm688 = vcmp.lt.s32.totalorder %v687, 34
        %v689 = vsel %vm688, %v679, %v683
        %v690 = vsel %vm688, %v681, %v685
        %v691 = vsel %vm688, %v683, %v679
        %v692 = vsel %vm688, %v685, %v681
        %v693 = vld [vmem:[%s272] sm:$0xff]
        %v694 = vld [vmem:[%s272 + $0x8] sm:$0xff]
        %v695 = vld [vmem:[%s272 + $0x10] sm:$0xff]
        %v696 = vld [vmem:[%s272 + $0x18] sm:$0xff]
        %v697 = vmul.f32 %v691, %v693
        %v698 = vmul.f32 %v689, %v694
        %v699 = vmul.f32 %v692, %v695
        %v700 = vmul.f32 %v690, %v696
        %701 = vrot.lane.b32.xlu0 %v413, 32
        %v702 = vpop.permute.xlu0 %701
        %703 = vrot.lane.b32.xlu0 %v415, 32
        %v704 = vpop.permute.xlu0 %703
        %705 = vrot.lane.b32.xlu0 %v414, 32
        %v706 = vpop.permute.xlu0 %705
        %707 = vrot.lane.b32.xlu0 %v416, 32
        %v708 = vpop.permute.xlu0 %707
        %vm709 = vcmp.lt.s32.totalorder %v687, 32
        %v710 = vsel %vm709, %v702, %v706
        %v711 = vsel %vm709, %v704, %v708
        %v712 = vsel %vm709, %v706, %v702
        %v713 = vsel %vm709, %v708, %v704
        %s714 = scalar_lea.vmem %s272, 32
        %v715 = vld [vmem:[%s714] sm:$0xff]
        %v716 = vld [vmem:[%s714 + $0x8] sm:$0xff]
        %v717 = vld [vmem:[%s714 + $0x10] sm:$0xff]
        %v718 = vld [vmem:[%s714 + $0x18] sm:$0xff]
        %v719 = vmul.f32 %v712, %v715
        %v720 = vmul.f32 %v710, %v716
        %v721 = vmul.f32 %v713, %v717
        %v722 = vmul.f32 %v711, %v718
        %v723 = vadd.f32 %v697, %v719
        %v724 = vadd.f32 %v698, %v720
        %v725 = vadd.f32 %v699, %v721
        %v726 = vadd.f32 %v700, %v722
        %727 = vrot.lane.b32.xlu0 %v413, 30
        %v728 = vpop.permute.xlu0 %727
        %729 = vrot.lane.b32.xlu0 %v415, 30
        %v730 = vpop.permute.xlu0 %729
        %731 = vrot.lane.b32.xlu0 %v414, 30
        %v732 = vpop.permute.xlu0 %731
        %733 = vrot.lane.b32.xlu0 %v416, 30
        %v734 = vpop.permute.xlu0 %733
        %vm735 = vcmp.lt.s32.totalorder %v687, 30
        %v736 = vsel %vm735, %v728, %v732
        %v737 = vsel %vm735, %v730, %v734
        %v738 = vsel %vm735, %v732, %v728
        %v739 = vsel %vm735, %v734, %v730
        %s740 = scalar_lea.vmem %s272, 64
        %v741 = vld [vmem:[%s740] sm:$0xff]
        %v742 = vld [vmem:[%s740 + $0x8] sm:$0xff]
        %v743 = vld [vmem:[%s740 + $0x10] sm:$0xff]
        %v744 = vld [vmem:[%s740 + $0x18] sm:$0xff]
        %v745 = vmul.f32 %v738, %v741
        %v746 = vmul.f32 %v736, %v742
        %v747 = vmul.f32 %v739, %v743
        %v748 = vmul.f32 %v737, %v744
        %v749 = vadd.f32 %v723, %v745
        %v750 = vadd.f32 %v724, %v746
        %v751 = vadd.f32 %v725, %v747
        %v752 = vadd.f32 %v726, %v748
        %753 = vrot.lane.b32.xlu0 %v413, 2
        %v754 = vpop.permute.xlu0 %753
        %755 = vrot.lane.b32.xlu0 %v415, 2
        %v756 = vpop.permute.xlu0 %755
        %757 = vrot.lane.b32.xlu0 %v414, 2
        %v758 = vpop.permute.xlu0 %757
        %759 = vrot.lane.b32.xlu0 %v416, 2
        %v760 = vpop.permute.xlu0 %759
        %vm761 = vcmp.lt.s32.totalorder %v687, 2
        %v762 = vsel %vm761, %v754, %v758
        %v763 = vsel %vm761, %v756, %v760
        %v764 = vsel %vm761, %v758, %v754
        %v765 = vsel %vm761, %v760, %v756
        %s766 = scalar_lea.vmem %s272, 96
        %v767 = vld [vmem:[%s766] sm:$0xff]
        %v768 = vld [vmem:[%s766 + $0x8] sm:$0xff]
        %v769 = vld [vmem:[%s766 + $0x10] sm:$0xff]
        %v770 = vld [vmem:[%s766 + $0x18] sm:$0xff]
        %v771 = vmul.f32 %v764, %v767
        %v772 = vmul.f32 %v762, %v768
        %v773 = vmul.f32 %v765, %v769
        %v774 = vmul.f32 %v763, %v770
        %s775 = scalar_lea.vmem %s272, 128
        %v776 = vld [vmem:[%s775] sm:$0xff]
        %v777 = vld [vmem:[%s775 + $0x8] sm:$0xff]
        %v778 = vld [vmem:[%s775 + $0x10] sm:$0xff]
        %v779 = vld [vmem:[%s775 + $0x18] sm:$0xff]
        %v780 = vmul.f32 %v413, %v776
        %v781 = vmul.f32 %v414, %v777
        %v782 = vmul.f32 %v415, %v778
        %v783 = vmul.f32 %v416, %v779
        %v784 = vadd.f32 %v771, %v780
        %v785 = vadd.f32 %v772, %v781
        %v786 = vadd.f32 %v773, %v782
        %v787 = vadd.f32 %v774, %v783
        %788 = vrot.lane.b32.xlu0 %v413, 126
        %v789 = vpop.permute.xlu0 %788
        %790 = vrot.lane.b32.xlu0 %v415, 126
        %v791 = vpop.permute.xlu0 %790
        %792 = vrot.lane.b32.xlu0 %v414, 126
        %v793 = vpop.permute.xlu0 %792
        %794 = vrot.lane.b32.xlu0 %v416, 126
        %v795 = vpop.permute.xlu0 %794
        %vm796 = vcmp.lt.s32.totalorder %v687, 126
        %v797 = vsel %vm796, %v789, %v793
        %v798 = vsel %vm796, %v791, %v795
        %v799 = vsel %vm796, %v793, %v789
        %v800 = vsel %vm796, %v795, %v791
        %s801 = scalar_lea.vmem %s272, 160
        %v802 = vld [vmem:[%s801] sm:$0xff]
        %v803 = vld [vmem:[%s801 + $0x8] sm:$0xff]
        %v804 = vld [vmem:[%s801 + $0x10] sm:$0xff]
        %v805 = vld [vmem:[%s801 + $0x18] sm:$0xff]
        %v806 = vmul.f32 %v797, %v802
        %v807 = vmul.f32 %v799, %v803
        %v808 = vmul.f32 %v798, %v804
        %v809 = vmul.f32 %v800, %v805
        %v810 = vadd.f32 %v784, %v806
        %v811 = vadd.f32 %v785, %v807
        %v812 = vadd.f32 %v786, %v808
        %v813 = vadd.f32 %v787, %v809
        %814 = vrot.lane.b32.xlu0 %v413, 98
        %v815 = vpop.permute.xlu0 %814
        %816 = vrot.lane.b32.xlu0 %v415, 98
        %v817 = vpop.permute.xlu0 %816
        %818 = vrot.lane.b32.xlu0 %v414, 98
        %v819 = vpop.permute.xlu0 %818
        %820 = vrot.lane.b32.xlu0 %v416, 98
        %v821 = vpop.permute.xlu0 %820
        %vm822 = vcmp.lt.s32.totalorder %v687, 98
        %v823 = vsel %vm822, %v815, %v819
        %v824 = vsel %vm822, %v817, %v821
        %v825 = vsel %vm822, %v819, %v815
        %v826 = vsel %vm822, %v821, %v817
        %s827 = scalar_lea.vmem %s272, 192
        %v828 = vld [vmem:[%s827] sm:$0xff]
        %v829 = vld [vmem:[%s827 + $0x8] sm:$0xff]
        %v830 = vld [vmem:[%s827 + $0x10] sm:$0xff]
        %v831 = vld [vmem:[%s827 + $0x18] sm:$0xff]
        %v832 = vmul.f32 %v823, %v828
        %v833 = vmul.f32 %v825, %v829
        %v834 = vmul.f32 %v824, %v830
        %v835 = vmul.f32 %v826, %v831
        %836 = vrot.lane.b32.xlu0 %v413, 96
        %v837 = vpop.permute.xlu0 %836
        %838 = vrot.lane.b32.xlu0 %v415, 96
        %v839 = vpop.permute.xlu0 %838
        %840 = vrot.lane.b32.xlu0 %v414, 96
        %v841 = vpop.permute.xlu0 %840
        %842 = vrot.lane.b32.xlu0 %v416, 96
        %v843 = vpop.permute.xlu0 %842
        %vm844 = vcmp.lt.s32.totalorder %v687, 96
        %v845 = vsel %vm844, %v837, %v841
        %v846 = vsel %vm844, %v839, %v843
        %v847 = vsel %vm844, %v841, %v837
        %v848 = vsel %vm844, %v843, %v839
        %s849 = scalar_lea.vmem %s272, 224
        %v850 = vld [vmem:[%s849] sm:$0xff]
        %v851 = vld [vmem:[%s849 + $0x8] sm:$0xff]
        %v852 = vld [vmem:[%s849 + $0x10] sm:$0xff]
        %v853 = vld [vmem:[%s849 + $0x18] sm:$0xff]
        %v854 = vmul.f32 %v845, %v850
        %v855 = vmul.f32 %v847, %v851
        %v856 = vmul.f32 %v846, %v852
        %v857 = vmul.f32 %v848, %v853
        %v858 = vadd.f32 %v832, %v854
        %v859 = vadd.f32 %v833, %v855
        %v860 = vadd.f32 %v834, %v856
        %v861 = vadd.f32 %v835, %v857
        %862 = vrot.lane.b32.xlu0 %v413, 94
        %v863 = vpop.permute.xlu0 %862
        %864 = vrot.lane.b32.xlu0 %v415, 94
        %v865 = vpop.permute.xlu0 %864
        %866 = vrot.lane.b32.xlu0 %v414, 94
        %v867 = vpop.permute.xlu0 %866
        %868 = vrot.lane.b32.xlu0 %v416, 94
        %v869 = vpop.permute.xlu0 %868
        %vm870 = vcmp.lt.s32.totalorder %v687, 94
        %v871 = vsel %vm870, %v863, %v867
        %v872 = vsel %vm870, %v865, %v869
        %v873 = vsel %vm870, %v867, %v863
        %v874 = vsel %vm870, %v869, %v865
        %s875 = scalar_lea.vmem %s272, 256
        %v876 = vld [vmem:[%s875] sm:$0xff]
        %v877 = vld [vmem:[%s875 + $0x8] sm:$0xff]
        %v878 = vld [vmem:[%s875 + $0x10] sm:$0xff]
        %v879 = vld [vmem:[%s875 + $0x18] sm:$0xff]
        %v880 = vmul.f32 %v871, %v876
        %v881 = vmul.f32 %v873, %v877
        %v882 = vmul.f32 %v872, %v878
        %v883 = vmul.f32 %v874, %v879
        %v884 = vadd.f32 %v858, %v880
        %v885 = vadd.f32 %v859, %v881
        %v886 = vadd.f32 %v860, %v882
        %v887 = vadd.f32 %v861, %v883
        %v888 = vadd.f32 %v749, %v810
        %v889 = vadd.f32 %v750, %v811
        %v890 = vadd.f32 %v751, %v812
        %v891 = vadd.f32 %v752, %v813
        %v892 = vadd.f32 %v884, %v417
        %v893 = vadd.f32 %v885, %v418
        %v894 = vadd.f32 %v886, %v419
        %v895 = vadd.f32 %v887, %v420
        %v896 = vadd.f32 %v888, %v892
        %v897 = vadd.f32 %v889, %v893
        %v898 = vadd.f32 %v890, %v894
        %v899 = vadd.f32 %v891, %v895
        %v900 = vmul.f32 %v896, 0.5
        %v901 = vmul.f32 %v897, 0.5
        %v902 = vmul.f32 %v898, 0.5
        %v903 = vmul.f32 %v899, 0.5
        %v904 = vmul.f32 %v896, 0.70710677
        %v905 = vmul.f32 %v897, 0.70710677
        %v906 = vmul.f32 %v898, 0.70710677
        %v907 = vmul.f32 %v899, 0.70710677
        %v908 = verf.f32.pop %v904
        %v909 = verf.f32.pop %v905
        %v910 = verf.f32.pop %v906
        %v911 = verf.f32.pop %v907
        %v912 = vadd.f32 %v908, 1.0
        %v913 = vadd.f32 %v909, 1.0
        %v914 = vadd.f32 %v910, 1.0
        %v915 = vadd.f32 %v911, 1.0
        %v916 = vmul.f32 %v900, %v912
        %v917 = vmul.f32 %v901, %v913
        %v918 = vmul.f32 %v902, %v914
        %v919 = vmul.f32 %v903, %v915
        %920 = vst [vmem:[#allocation2] sm:$0xff] %v916
        %921 = vst [vmem:[#allocation2 + $0x8] sm:$0xff] %v917
        %922 = vst [vmem:[#allocation2 + $0x10] sm:$0xff] %v918
        %923 = vst [vmem:[#allocation2 + $0x18] sm:$0xff] %v919
        %924 = vst [vmem:[%s286] sm:$0xff] %v916
        %925 = vst [vmem:[%s286 + $0x8] sm:$0xff] %v917
        %926 = vst [vmem:[%s286 + $0x10] sm:$0xff] %v918
        %927 = vst [vmem:[%s286 + $0x18] sm:$0xff] %v919
      $region52: #{_lambda_.1} parent=39 // pred_fallthru
        _
      %p928 = scmp.eq.s32.totalorder %s21, 2
      // Predicated region
      $region53: #{_lambda_.1} parent=39 // pred_check
        %p929 = pneg %p928
      $region54: #{_lambda_.1} parent=39 // pred_check_branch
        %931 = sbr.rel (%p929) target = $region56
      $region55: #{_lambda_.1} parent=39 // pred_region
        %932 = vrot.lane.b32.xlu0 %v413, 51
        %v933 = vpop.permute.xlu0 %932
        %934 = vrot.lane.b32.xlu0 %v415, 51
        %v935 = vpop.permute.xlu0 %934
        %936 = vrot.lane.b32.xlu0 %v414, 51
        %v937 = vpop.permute.xlu0 %936
        %938 = vrot.lane.b32.xlu0 %v416, 51
        %v939 = vpop.permute.xlu0 %938
        %v940 = vlaneseq
        %v941 = vand.u32 %v940, 127
        %vm942 = vcmp.lt.s32.totalorder %v941, 51
        %v943 = vsel %vm942, %v933, %v937
        %v944 = vsel %vm942, %v935, %v939
        %v945 = vsel %vm942, %v937, %v933
        %v946 = vsel %vm942, %v939, %v935
        %v947 = vld [vmem:[%s272] sm:$0xff]
        %v948 = vld [vmem:[%s272 + $0x8] sm:$0xff]
        %v949 = vld [vmem:[%s272 + $0x10] sm:$0xff]
        %v950 = vld [vmem:[%s272 + $0x18] sm:$0xff]
        %v951 = vmul.f32 %v945, %v947
        %v952 = vmul.f32 %v943, %v948
        %v953 = vmul.f32 %v946, %v949
        %v954 = vmul.f32 %v944, %v950
        %955 = vrot.lane.b32.xlu0 %v413, 48
        %v956 = vpop.permute.xlu0 %955
        %957 = vrot.lane.b32.xlu0 %v415, 48
        %v958 = vpop.permute.xlu0 %957
        %959 = vrot.lane.b32.xlu0 %v414, 48
        %v960 = vpop.permute.xlu0 %959
        %961 = vrot.lane.b32.xlu0 %v416, 48
        %v962 = vpop.permute.xlu0 %961
        %vm963 = vcmp.lt.s32.totalorder %v941, 48
        %v964 = vsel %vm963, %v956, %v960
        %v965 = vsel %vm963, %v958, %v962
        %v966 = vsel %vm963, %v960, %v956
        %v967 = vsel %vm963, %v962, %v958
        %s968 = scalar_lea.vmem %s272, 32
        %v969 = vld [vmem:[%s968] sm:$0xff]
        %v970 = vld [vmem:[%s968 + $0x8] sm:$0xff]
        %v971 = vld [vmem:[%s968 + $0x10] sm:$0xff]
        %v972 = vld [vmem:[%s968 + $0x18] sm:$0xff]
        %v973 = vmul.f32 %v966, %v969
        %v974 = vmul.f32 %v964, %v970
        %v975 = vmul.f32 %v967, %v971
        %v976 = vmul.f32 %v965, %v972
        %v977 = vadd.f32 %v951, %v973
        %v978 = vadd.f32 %v952, %v974
        %v979 = vadd.f32 %v953, %v975
        %v980 = vadd.f32 %v954, %v976
        %981 = vrot.lane.b32.xlu0 %v413, 45
        %v982 = vpop.permute.xlu0 %981
        %983 = vrot.lane.b32.xlu0 %v415, 45
        %v984 = vpop.permute.xlu0 %983
        %985 = vrot.lane.b32.xlu0 %v414, 45
        %v986 = vpop.permute.xlu0 %985
        %987 = vrot.lane.b32.xlu0 %v416, 45
        %v988 = vpop.permute.xlu0 %987
        %vm989 = vcmp.lt.s32.totalorder %v941, 45
        %v990 = vsel %vm989, %v982, %v986
        %v991 = vsel %vm989, %v984, %v988
        %v992 = vsel %vm989, %v986, %v982
        %v993 = vsel %vm989, %v988, %v984
        %s994 = scalar_lea.vmem %s272, 64
        %v995 = vld [vmem:[%s994] sm:$0xff]
        %v996 = vld [vmem:[%s994 + $0x8] sm:$0xff]
        %v997 = vld [vmem:[%s994 + $0x10] sm:$0xff]
        %v998 = vld [vmem:[%s994 + $0x18] sm:$0xff]
        %v999 = vmul.f32 %v992, %v995
        %v1000 = vmul.f32 %v990, %v996
        %v1001 = vmul.f32 %v993, %v997
        %v1002 = vmul.f32 %v991, %v998
        %v1003 = vadd.f32 %v977, %v999
        %v1004 = vadd.f32 %v978, %v1000
        %v1005 = vadd.f32 %v979, %v1001
        %v1006 = vadd.f32 %v980, %v1002
        %1007 = vrot.lane.b32.xlu0 %v413, 3
        %v1008 = vpop.permute.xlu0 %1007
        %1009 = vrot.lane.b32.xlu0 %v415, 3
        %v1010 = vpop.permute.xlu0 %1009
        %1011 = vrot.lane.b32.xlu0 %v414, 3
        %v1012 = vpop.permute.xlu0 %1011
        %1013 = vrot.lane.b32.xlu0 %v416, 3
        %v1014 = vpop.permute.xlu0 %1013
        %vm1015 = vcmp.lt.s32.totalorder %v941, 3
        %v1016 = vsel %vm1015, %v1008, %v1012
        %v1017 = vsel %vm1015, %v1010, %v1014
        %v1018 = vsel %vm1015, %v1012, %v1008
        %v1019 = vsel %vm1015, %v1014, %v1010
        %s1020 = scalar_lea.vmem %s272, 96
        %v1021 = vld [vmem:[%s1020] sm:$0xff]
        %v1022 = vld [vmem:[%s1020 + $0x8] sm:$0xff]
        %v1023 = vld [vmem:[%s1020 + $0x10] sm:$0xff]
        %v1024 = vld [vmem:[%s1020 + $0x18] sm:$0xff]
        %v1025 = vmul.f32 %v1018, %v1021
        %v1026 = vmul.f32 %v1016, %v1022
        %v1027 = vmul.f32 %v1019, %v1023
        %v1028 = vmul.f32 %v1017, %v1024
        %s1029 = scalar_lea.vmem %s272, 128
        %v1030 = vld [vmem:[%s1029] sm:$0xff]
        %v1031 = vld [vmem:[%s1029 + $0x8] sm:$0xff]
        %v1032 = vld [vmem:[%s1029 + $0x10] sm:$0xff]
        %v1033 = vld [vmem:[%s1029 + $0x18] sm:$0xff]
        %v1034 = vmul.f32 %v413, %v1030
        %v1035 = vmul.f32 %v414, %v1031
        %v1036 = vmul.f32 %v415, %v1032
        %v1037 = vmul.f32 %v416, %v1033
        %v1038 = vadd.f32 %v1025, %v1034
        %v1039 = vadd.f32 %v1026, %v1035
        %v1040 = vadd.f32 %v1027, %v1036
        %v1041 = vadd.f32 %v1028, %v1037
        %1042 = vrot.lane.b32.xlu0 %v413, 125
        %v1043 = vpop.permute.xlu0 %1042
        %1044 = vrot.lane.b32.xlu0 %v415, 125
        %v1045 = vpop.permute.xlu0 %1044
        %1046 = vrot.lane.b32.xlu0 %v414, 125
        %v1047 = vpop.permute.xlu0 %1046
        %1048 = vrot.lane.b32.xlu0 %v416, 125
        %v1049 = vpop.permute.xlu0 %1048
        %vm1050 = vcmp.lt.s32.totalorder %v941, 125
        %v1051 = vsel %vm1050, %v1043, %v1047
        %v1052 = vsel %vm1050, %v1045, %v1049
        %v1053 = vsel %vm1050, %v1047, %v1043
        %v1054 = vsel %vm1050, %v1049, %v1045
        %s1055 = scalar_lea.vmem %s272, 160
        %v1056 = vld [vmem:[%s1055] sm:$0xff]
        %v1057 = vld [vmem:[%s1055 + $0x8] sm:$0xff]
        %v1058 = vld [vmem:[%s1055 + $0x10] sm:$0xff]
        %v1059 = vld [vmem:[%s1055 + $0x18] sm:$0xff]
        %v1060 = vmul.f32 %v1051, %v1056
        %v1061 = vmul.f32 %v1053, %v1057
        %v1062 = vmul.f32 %v1052, %v1058
        %v1063 = vmul.f32 %v1054, %v1059
        %v1064 = vadd.f32 %v1038, %v1060
        %v1065 = vadd.f32 %v1039, %v1061
        %v1066 = vadd.f32 %v1040, %v1062
        %v1067 = vadd.f32 %v1041, %v1063
        %1068 = vrot.lane.b32.xlu0 %v413, 83
        %v1069 = vpop.permute.xlu0 %1068
        %1070 = vrot.lane.b32.xlu0 %v415, 83
        %v1071 = vpop.permute.xlu0 %1070
        %1072 = vrot.lane.b32.xlu0 %v414, 83
        %v1073 = vpop.permute.xlu0 %1072
        %1074 = vrot.lane.b32.xlu0 %v416, 83
        %v1075 = vpop.permute.xlu0 %1074
        %vm1076 = vcmp.lt.s32.totalorder %v941, 83
        %v1077 = vsel %vm1076, %v1069, %v1073
        %v1078 = vsel %vm1076, %v1071, %v1075
        %v1079 = vsel %vm1076, %v1073, %v1069
        %v1080 = vsel %vm1076, %v1075, %v1071
        %s1081 = scalar_lea.vmem %s272, 192
        %v1082 = vld [vmem:[%s1081] sm:$0xff]
        %v1083 = vld [vmem:[%s1081 + $0x8] sm:$0xff]
        %v1084 = vld [vmem:[%s1081 + $0x10] sm:$0xff]
        %v1085 = vld [vmem:[%s1081 + $0x18] sm:$0xff]
        %v1086 = vmul.f32 %v1077, %v1082
        %v1087 = vmul.f32 %v1079, %v1083
        %v1088 = vmul.f32 %v1078, %v1084
        %v1089 = vmul.f32 %v1080, %v1085
        %1090 = vrot.lane.b32.xlu0 %v413, 80
        %v1091 = vpop.permute.xlu0 %1090
        %1092 = vrot.lane.b32.xlu0 %v415, 80
        %v1093 = vpop.permute.xlu0 %1092
        %1094 = vrot.lane.b32.xlu0 %v414, 80
        %v1095 = vpop.permute.xlu0 %1094
        %1096 = vrot.lane.b32.xlu0 %v416, 80
        %v1097 = vpop.permute.xlu0 %1096
        %vm1098 = vcmp.lt.s32.totalorder %v941, 80
        %v1099 = vsel %vm1098, %v1091, %v1095
        %v1100 = vsel %vm1098, %v1093, %v1097
        %v1101 = vsel %vm1098, %v1095, %v1091
        %v1102 = vsel %vm1098, %v1097, %v1093
        %s1103 = scalar_lea.vmem %s272, 224
        %v1104 = vld [vmem:[%s1103] sm:$0xff]
        %v1105 = vld [vmem:[%s1103 + $0x8] sm:$0xff]
        %v1106 = vld [vmem:[%s1103 + $0x10] sm:$0xff]
        %v1107 = vld [vmem:[%s1103 + $0x18] sm:$0xff]
        %v1108 = vmul.f32 %v1099, %v1104
        %v1109 = vmul.f32 %v1101, %v1105
        %v1110 = vmul.f32 %v1100, %v1106
        %v1111 = vmul.f32 %v1102, %v1107
        %v1112 = vadd.f32 %v1086, %v1108
        %v1113 = vadd.f32 %v1087, %v1109
        %v1114 = vadd.f32 %v1088, %v1110
        %v1115 = vadd.f32 %v1089, %v1111
        %1116 = vrot.lane.b32.xlu0 %v413, 77
        %v1117 = vpop.permute.xlu0 %1116
        %1118 = vrot.lane.b32.xlu0 %v415, 77
        %v1119 = vpop.permute.xlu0 %1118
        %1120 = vrot.lane.b32.xlu0 %v414, 77
        %v1121 = vpop.permute.xlu0 %1120
        %1122 = vrot.lane.b32.xlu0 %v416, 77
        %v1123 = vpop.permute.xlu0 %1122
        %vm1124 = vcmp.lt.s32.totalorder %v941, 77
        %v1125 = vsel %vm1124, %v1117, %v1121
        %v1126 = vsel %vm1124, %v1119, %v1123
        %v1127 = vsel %vm1124, %v1121, %v1117
        %v1128 = vsel %vm1124, %v1123, %v1119
        %s1129 = scalar_lea.vmem %s272, 256
        %v1130 = vld [vmem:[%s1129] sm:$0xff]
        %v1131 = vld [vmem:[%s1129 + $0x8] sm:$0xff]
        %v1132 = vld [vmem:[%s1129 + $0x10] sm:$0xff]
        %v1133 = vld [vmem:[%s1129 + $0x18] sm:$0xff]
        %v1134 = vmul.f32 %v1125, %v1130
        %v1135 = vmul.f32 %v1127, %v1131
        %v1136 = vmul.f32 %v1126, %v1132
        %v1137 = vmul.f32 %v1128, %v1133
        %v1138 = vadd.f32 %v1112, %v1134
        %v1139 = vadd.f32 %v1113, %v1135
        %v1140 = vadd.f32 %v1114, %v1136
        %v1141 = vadd.f32 %v1115, %v1137
        %v1142 = vadd.f32 %v1003, %v1064
        %v1143 = vadd.f32 %v1004, %v1065
        %v1144 = vadd.f32 %v1005, %v1066
        %v1145 = vadd.f32 %v1006, %v1067
        %v1146 = vadd.f32 %v1138, %v417
        %v1147 = vadd.f32 %v1139, %v418
        %v1148 = vadd.f32 %v1140, %v419
        %v1149 = vadd.f32 %v1141, %v420
        %v1150 = vadd.f32 %v1142, %v1146
        %v1151 = vadd.f32 %v1143, %v1147
        %v1152 = vadd.f32 %v1144, %v1148
        %v1153 = vadd.f32 %v1145, %v1149
        %v1154 = vmul.f32 %v1150, 0.5
        %v1155 = vmul.f32 %v1151, 0.5
        %v1156 = vmul.f32 %v1152, 0.5
        %v1157 = vmul.f32 %v1153, 0.5
        %v1158 = vmul.f32 %v1150, 0.70710677
        %v1159 = vmul.f32 %v1151, 0.70710677
        %v1160 = vmul.f32 %v1152, 0.70710677
        %v1161 = vmul.f32 %v1153, 0.70710677
        %v1162 = verf.f32.pop %v1158
        %v1163 = verf.f32.pop %v1159
        %v1164 = verf.f32.pop %v1160
        %v1165 = verf.f32.pop %v1161
        %v1166 = vadd.f32 %v1162, 1.0
        %v1167 = vadd.f32 %v1163, 1.0
        %v1168 = vadd.f32 %v1164, 1.0
        %v1169 = vadd.f32 %v1165, 1.0
        %v1170 = vmul.f32 %v1154, %v1166
        %v1171 = vmul.f32 %v1155, %v1167
        %v1172 = vmul.f32 %v1156, %v1168
        %v1173 = vmul.f32 %v1157, %v1169
        %1174 = vst [vmem:[#allocation2] sm:$0xff] %v1170
        %1175 = vst [vmem:[#allocation2 + $0x8] sm:$0xff] %v1171
        %1176 = vst [vmem:[#allocation2 + $0x10] sm:$0xff] %v1172
        %1177 = vst [vmem:[#allocation2 + $0x18] sm:$0xff] %v1173
        %1178 = vst [vmem:[%s286] sm:$0xff] %v1170
        %1179 = vst [vmem:[%s286 + $0x8] sm:$0xff] %v1171
        %1180 = vst [vmem:[%s286 + $0x10] sm:$0xff] %v1172
        %1181 = vst [vmem:[%s286 + $0x18] sm:$0xff] %v1173
      $region56: #{_lambda_.1} parent=39 // pred_fallthru
        _
      %p1182 = scmp.lt.s32.totalorder %s20, 1
      %s1183 = scalar_select %p1182, %s20, 1
      %p1184 = scmp.lt.s32.totalorder %s21, 2
      %s1185 = scalar_select %p1184, %s21, 2
      %s1186 = smul.addr %s1185, 4
      %s1187 = smul.addr %s1183, 12
      %s1188 = sadd.s32 %s1186, %s1187
      %s1189 = smul.addr %s1188, 8
      %s1190 = scalar_lea.vmem %s5, %s1189
      // Predicated region
      $region57: #{_lambda_.1} parent=39 // pred_check
        %p1191 = pneg %p168
      $region58: #{_lambda_.1} parent=39 // pred_check_branch
        %1193 = sbr.rel (%p1191) target = $region60
      $region59: #{_lambda_.1} parent=39 // pred_region
        _
      $region60: #{_lambda_.1} parent=39 // pred_fallthru
        _
    $region40: #{_lambda_.1} parent=5 // pred_fallthru
      _
    %p1194 = scmp.le.s32.totalorder 2, %s11
    // Predicated region
    $region61: #{_lambda_.1} parent=5 // pred_check
      %p1195 = pneg %p1194
    $region62: #{_lambda_.1} parent=5 // pred_check_branch
      %1197 = sbr.rel (%p1195) target = $region64
    $region63: #{_lambda_.1} parent=5 // pred_region
      %s1198 = ssub.s32 %s11, 2
      // Predicated region
      $region65: #{_lambda_.1} parent=63 // pred_check
        %p1199 = pneg %p174
      $region66: #{_lambda_.1} parent=63 // pred_check_branch
        %1201 = sbr.rel (%p1199) target = $region68
      $region67: #{_lambda_.1} parent=63 // pred_region
        %p1202 = scmp.lt.s32.totalorder %s22, 1
        %s1203 = scalar_select %p1202, %s22, 1
        %p1204 = scmp.lt.s32.totalorder %s23, 2
        %s1205 = scalar_select %p1204, %s23, 2
        %s1206 = smul.addr %s1205, 4
        %s1207 = smul.addr %s1203, 12
        %s1208 = sadd.s32 %s1206, %s1207
        %s1209 = smul.addr %s1208, 8
        %s1210 = scalar_lea.vmem %s5, %s1209
      $region68: #{_lambda_.1} parent=63 // pred_fallthru
        _
    $region64: #{_lambda_.1} parent=5 // pred_fallthru
      _
  $region6: #{_lambda_.1} parent=0 // loop_footer
    %s15 = sadd.s32 1, %s11
  $region7: #{_lambda_.1} parent=0 // loop_footer_branch
    %10 = sbr.rel target = $region3
  $region8: #{_lambda_.1} parent=0 // loop_exit
    _

</llo_original>
